<compile_context>
chip_gen: v7x
topology: tpu7x:2x2x1
jax: 0.10.0
libtpu: 0.0.40
codegen_flags: <defaults>
</compile_context>

<pallas_src>
import functools

import jax
import jax.numpy as jnp
from jax.experimental import pallas as pl
from jax.experimental.pallas import tpu as pltpu

_TM = 512      # output-row tile
_TK = 1024     # reduction tile for the N^2 adjacency stream
_TK_XW = 256   # reduction tile for the (small) X @ W pass
_RESIDENT_B_BYTES = 12 * 1024 * 1024   # per-buffer budget for a resident RHS


def _pad_to(n, m):
    return ((n + m - 1) // m) * m


def _pad2d(x, rows, cols):
    r, c = x.shape
    return jnp.pad(x, ((0, rows - r), (0, cols - c)))


@functools.lru_cache(maxsize=None)
def _vmem_limit_bytes():
    # ~56 MiB on v7x (64 MiB physical), 100 MiB on v5e/v6e (128 MiB physical).
    try:
        cap = pltpu.get_tpu_info().vmem_capacity_bytes
    except Exception:
        cap = 64 * 1024 * 1024
    return int(min(cap - 8 * 1024 * 1024, 100 * 1024 * 1024))


def _to_bf16(v):
    if v.dtype == jnp.bfloat16:
        return v
    if jnp.issubdtype(v.dtype, jnp.integer):
        v = v.astype(jnp.float32)
    return v.astype(jnp.bfloat16)


def _mm_kernel(a_ref, b_ref, scale_ref, *rest, tk, b_resident, finalize):
    """acc += A_tile @ B_slice over the reduction grid axis.

    Epilogue (last reduction step): row-scale the f32 accumulator (folded
    D^-1/2 normalization); the finalize pass additionally adds the bias and
    applies a numerically-stable row-wise log_softmax (all in f32).
    """
    if finalize:
        bias_ref, o_ref, acc_ref = rest
    else:
        o_ref, acc_ref = rest

    k = pl.program_id(1)

    @pl.when(k == 0)
    def _():
        acc_ref[...] = jnp.zeros_like(acc_ref)

    a = _to_bf16(a_ref[...])
    if b_resident:
        kk = pl.multiple_of(k * tk, tk)
        b = b_ref[pl.ds(kk, tk), :]          # slice the VMEM-resident RHS
    else:
        b = b_ref[...]
    b = _to_bf16(b)
    acc_ref[...] += jnp.dot(a, b, preferred_element_type=jnp.float32)

    @pl.when(k == pl.num_programs(1) - 1)
    def _():
        h = acc_ref[...] * scale_ref[...]            # (TM, Cp) * (TM, 1) f32
        if finalize:
            logits = h + bias_ref[...]               # (TM, Cp) + (1, Cp)
            m = jnp.max(logits, axis=1, keepdims=True)
            z = logits - m
            lse = jnp.log(jnp.sum(jnp.exp(z), axis=1, keepdims=True))
            o_ref[...] = (z - lse).astype(o_ref.dtype)
        else:
            o_ref[...] = h.astype(o_ref.dtype)


def _tiled_matmul(a, b, row_scale, bias, *, tk, finalize):
    """a: (M, Kd) bf16/int8, b: (Kd, Cp) f32, row_scale: (M, 1) f32,
    bias: (1, Cp) f32 (only when finalize). Returns (M, Cp) f32."""
    M, Kd = a.shape
    Kb, Cp = b.shape
    assert Kb == Kd and M % _TM == 0 and Kd % tk == 0 and Cp % 128 == 0

    b_resident = (Kd * Cp * b.dtype.itemsize) <= _RESIDENT_B_BYTES
    kernel = functools.partial(_mm_kernel, tk=tk, b_resident=b_resident,
                               finalize=finalize)

    in_specs = [
        # A: streamed row/reduction tiles (the dominant HBM stream).
        # TODO(synk): add pipeline_mode=pl.Buffered(3) here if the A DMA is
        # still exposed in a trace after the tiling changes.
        pl.BlockSpec((_TM, tk), lambda i, k: (i, k)),
        # B: fetched once and kept VMEM-resident (constant block index) when
        # it fits the budget, otherwise streamed per reduction step.
        (pl.BlockSpec((Kd, Cp), lambda i, k: (0, 0)) if b_resident
         else pl.BlockSpec((tk, Cp), lambda i, k: (k, 0))),
        # Folded D^-1/2 normalization, one scale per output row.
        pl.BlockSpec((_TM, 1), lambda i, k: (i, 0)),
    ]
    operands = [a, b, row_scale]
    if finalize:
        in_specs.append(pl.BlockSpec((1, Cp), lambda i, k: (0, 0)))
        operands.append(bias)

    return pl.pallas_call(
        kernel,
        out_shape=jax.ShapeDtypeStruct((M, Cp), jnp.float32),
        grid_spec=pltpu.PrefetchScalarGridSpec(
            num_scalar_prefetch=0,
            grid=(M // _TM, Kd // tk),
            in_specs=in_specs,
            out_specs=pl.BlockSpec((_TM, Cp), lambda i, k: (i, 0)),
            scratch_shapes=[pltpu.VMEM((_TM, Cp), jnp.float32)],
        ),
        compiler_params=pltpu.CompilerParams(
            dimension_semantics=("parallel", "arbitrary"),
            vmem_limit_bytes=_vmem_limit_bytes()),
    )(*operands)


def sgc_forward(x, edge_index, w, b, *, K):
    """SGC forward: log_softmax(A_hat^K X W + b).

    x: (N, F) f32, edge_index: (2, E) int32, w: (F, C) f32, b: (C,) f32.
    """
    N, F = x.shape
    Fw, C = w.shape
    assert Fw == F

    Np = _pad_to(N, max(_TM, _TK))   # adjacency rows tiled by _TM, cols by _TK
    Fp = _pad_to(F, _TK_XW)
    Cp = _pad_to(C, 128)             # lane-dense output

    # ---- (A + I) built directly in padded int8: exact 0/1, 1 byte/elem ----
    src, dst = edge_index[0], edge_index[1]
    idx = jnp.arange(N)
    adj = jnp.zeros((Np, Np), jnp.int8)
    adj = adj.at[idx, idx].set(1)          # self loops (real nodes only)
    adj = adj.at[dst, src].set(1)          # message j -> i (duplicates dedup)

    deg = jnp.sum(adj, axis=1, dtype=jnp.int32).astype(jnp.float32)
    dinv = jnp.where(deg > 0.0, jax.lax.rsqrt(jnp.maximum(deg, 1.0)), 0.0)
    dinv = dinv.reshape(Np, 1)
    dinv2 = dinv * dinv
    ones = jnp.ones((Np, 1), jnp.float32)

    x_p = _pad2d(x, Np, Fp).astype(jnp.bfloat16)
    w_p = _pad2d(w.astype(jnp.float32), Fp, Cp)
    # Padded class columns get a huge negative bias so they vanish in the
    # softmax (the epilogue runs entirely in f32, so -1e30 is safe).
    bias = jnp.full((1, Cp), -1e30, jnp.float32).at[0, :C].set(
        b.astype(jnp.float32))

    # ---- algebraic reorder: A_hat^K (X W); normalization folded into f32
    # row scales:  A_hat^K = S (A+I) [S^2 (A+I)]^(K-1) S,  with S = D^{-1/2}.
    if K == 0:
        out_p = _tiled_matmul(x_p, w_p, ones, bias, tk=_TK_XW, finalize=True)
    else:
        g = _tiled_matmul(x_p, w_p, dinv, None, tk=_TK_XW, finalize=False)
        for _ in range(K - 1):
            g = _tiled_matmul(adj, g, dinv2, None, tk=_TK, finalize=False)
        out_p = _tiled_matmul(adj, g, dinv, bias, tk=_TK, finalize=True)

    return out_p[:N, :C]


def _reference(x, a_hat, w, b, K):
    h = x
    for _ in range(K):
        h = a_hat @ h
    logits = h @ w + b[None, :]
    return jax.nn.log_softmax(logits, axis=1)


if __name__ == "__main__":
    # Small deterministic problem: N=16 nodes, F=8 features, C=4 classes, K=2.
    N, F, C, K = 16, 8, 4, 2

    key = jax.random.PRNGKey(0)
    kx, kw, kb = jax.random.split(key, 3)

    x = jax.random.normal(kx, (N, F), dtype=jnp.float32)

    limit = (6.0 / (F + C)) ** 0.5
    w = jax.random.uniform(kw, (F, C), minval=-limit, maxval=limit,
                           dtype=jnp.float32)
    b = jax.random.uniform(kb, (C,), minval=-0.1, maxval=0.1,
                           dtype=jnp.float32)

    # Bidirectional chain graph: edges (i, i+1) and (i+1, i).
    src = jnp.concatenate([jnp.arange(N - 1), jnp.arange(1, N)])
    dst = jnp.concatenate([jnp.arange(1, N), jnp.arange(N - 1)])
    edge_index = jnp.stack([src, dst]).astype(jnp.int32)   # (2, E)

    out = sgc_forward(x, edge_index, w, b, K=K)
    out = jax.block_until_ready(out)

    # Plain-JAX reference with identical (deduped, self-loop) semantics.
    adj_ref = jnp.zeros((N, N), jnp.float32).at[dst, src].set(1.0)
    adj_ref = jnp.maximum(adj_ref, jnp.eye(N, dtype=jnp.float32))
    deg_ref = jnp.sum(adj_ref, axis=1)
    dinv_ref = jnp.where(deg_ref > 0, 1.0 / jnp.sqrt(deg_ref), 0.0)
    a_hat = dinv_ref[:, None] * adj_ref * dinv_ref[None, :]
    ref = _reference(x, a_hat, w, b, K)

    assert out.shape == (N, C)
    # int8 exact adjacency + f32 normalization/intermediates; the only bf16
    # rounding left is the MXU operand cast -> tighter tolerance than before.
    assert jnp.allclose(out, ref, atol=2e-2, rtol=2e-2), (
        float(jnp.max(jnp.abs(out - ref))))

    print("KERNEL_OK")
</pallas_src>

<mosaic_0001>
module attributes {stable_mosaic.version = 11 : i64} {
  func.func @_mm_kernel(%arg0: i32, %arg1: i32, %arg2: memref<512x256xbf16, #tpu.memory_space<vmem>>, %arg3: memref<256x128xf32, #tpu.memory_space<vmem>>, %arg4: memref<512x1xf32, #tpu.memory_space<vmem>>, %arg5: memref<512x128xf32, #tpu.memory_space<vmem>>, %arg6: memref<512x128xf32, #tpu.memory_space<vmem>>) attributes {dimension_semantics = [#tpu.dimension_semantics<parallel>, #tpu.dimension_semantics<arbitrary>], iteration_bounds = array<i64: 2, 1>, scalar_prefetch = 0 : i64, scratch_operands = 1 : i64, tpu.core_type = #tpu.core_type<tc>, window_params = [{transform_indices = @transform_0, window_bounds = array<i64: 512, 256>}, {pipeline_mode = #tpu.pipeline_mode<synchronous>, transform_indices = @transform_1, window_bounds = array<i64: 256, 128>}, {transform_indices = @transform_2, window_bounds = array<i64: 512, 1>}, {transform_indices = @transform_3, window_bounds = array<i64: 512, 128>}]} {
    %c0_i32 = arith.constant 0 : i32
    %0 = arith.cmpi eq, %arg1, %c0_i32 : i32
    %1 = arith.extui %0 : i1 to i32
    %c0_i32_0 = arith.constant 0 : i32
    %2 = arith.cmpi ne, %1, %c0_i32_0 : i32
    scf.if %2 {
      %cst_9 = arith.constant 0.000000e+00 : f32
      %16 = vector.broadcast %cst_9 : f32 to vector<512x128xf32>
      %c0_10 = arith.constant 0 : index
      %c0_11 = arith.constant 0 : index
      %17 = vector.load %arg6[%c0_10, %c0_11] : memref<512x128xf32, #tpu.memory_space<vmem>>, vector<512x128xf32>
      tpu.vector_store %arg6[%c0_10, %c0_11], %16 {strides = array<i32>} : memref<512x128xf32, #tpu.memory_space<vmem>>, vector<512x128xf32>,
    } else {
    }
    %c0 = arith.constant 0 : index
    %c0_1 = arith.constant 0 : index
    %3 = vector.load %arg2[%c0, %c0_1] : memref<512x256xbf16, #tpu.memory_space<vmem>>, vector<512x256xbf16>
    %c256_i32 = arith.constant 256 : i32
    %4 = arith.muli %arg1, %c256_i32 : i32
    %5 = tpu.assume_multiple %4, 256 : i32
    %6 = arith.index_cast %5 : i32 to index
    %c0_2 = arith.constant 0 : index
    %7 = vector.load %arg3[%6, %c0_2] : memref<256x128xf32, #tpu.memory_space<vmem>>, vector<256x128xf32>
    %8 = arith.truncf %7 : vector<256x128xf32> to vector<256x128xbf16>
    %c0_3 = arith.constant 0 : index
    %c0_4 = arith.constant 0 : index
    %9 = vector.load %arg6[%c0_3, %c0_4] : memref<512x128xf32, #tpu.memory_space<vmem>>, vector<512x128xf32>
    %cst = arith.constant dense<0.000000e+00> : vector<512x128xf32>
    %10 = tpu.matmul %3, %8, %cst {dimension_numbers = #tpu.dot_dimension_numbers<[1], [0], [0], [1], [0, 0, 1, 1], [], []>} : vector<512x256xbf16>, vector<256x128xbf16>, vector<512x128xf32> -> vector<512x128xf32>
    %11 = arith.addf %9, %10 : vector<512x128xf32>
    %c0_5 = arith.constant 0 : index
    %c0_6 = arith.constant 0 : index
    %12 = vector.load %arg6[%c0_5, %c0_6] : memref<512x128xf32, #tpu.memory_space<vmem>>, vector<512x128xf32>
    tpu.vector_store %arg6[%c0_5, %c0_6], %11 {strides = array<i32>} : memref<512x128xf32, #tpu.memory_space<vmem>>, vector<512x128xf32>,
    %c0_i32_7 = arith.constant 0 : i32
    %13 = arith.cmpi eq, %arg1, %c0_i32_7 : i32
    %14 = arith.extui %13 : i1 to i32
    %c0_i32_8 = arith.constant 0 : i32
    %15 = arith.cmpi ne, %14, %c0_i32_8 : i32
    scf.if %15 {
      %c0_9 = arith.constant 0 : index
      %c0_10 = arith.constant 0 : index
      %16 = vector.load %arg6[%c0_9, %c0_10] : memref<512x128xf32, #tpu.memory_space<vmem>>, vector<512x128xf32>
      %c0_11 = arith.constant 0 : index
      %c0_12 = arith.constant 0 : index
      %17 = vector.load %arg4[%c0_11, %c0_12] : memref<512x1xf32, #tpu.memory_space<vmem>>, vector<512x1xf32>
      %18 = vector.broadcast %17 : vector<512x1xf32> to vector<512x128xf32>
      %19 = arith.mulf %16, %18 : vector<512x128xf32>
      %c0_13 = arith.constant 0 : index
      %c0_14 = arith.constant 0 : index
      %20 = vector.load %arg5[%c0_13, %c0_14] : memref<512x128xf32, #tpu.memory_space<vmem>>, vector<512x128xf32>
      tpu.vector_store %arg5[%c0_13, %c0_14], %19 {strides = array<i32>} : memref<512x128xf32, #tpu.memory_space<vmem>>, vector<512x128xf32>,
    } else {
    }
    return
  }
  func.func @transform_0(%arg0: i32, %arg1: i32) -> (i32, i32) {
    %c0_i32 = arith.constant 0 : i32
    return %arg0, %arg1 : i32, i32
  }
  func.func @transform_1(%arg0: i32, %arg1: i32) -> (i32, i32) {
    %c0_i32 = arith.constant 0 : i32
    %c0_i32_0 = arith.constant 0 : i32
    %c0_i32_1 = arith.constant 0 : i32
    return %c0_i32, %c0_i32_0 : i32, i32
  }
  func.func @transform_2(%arg0: i32, %arg1: i32) -> (i32, i32) {
    %c0_i32 = arith.constant 0 : i32
    %c0_i32_0 = arith.constant 0 : i32
    return %arg0, %c0_i32 : i32, i32
  }
  func.func @transform_3(%arg0: i32, %arg1: i32) -> (i32, i32) {
    %c0_i32 = arith.constant 0 : i32
    %c0_i32_0 = arith.constant 0 : i32
    return %arg0, %c0_i32 : i32, i32
  }
}

</mosaic_0001>

<llo_original>
// kernel: tpu_custom_call.1
$region0: #{tpu_custom_call.1}
  #allocation0 [shape = 'u32[]', space=smem, size = 0x4, offset = 0x4, fixed_abs, tag = 'smem constant byte address 0x4 - core index']
  #allocation1 [shape = 'u32[144,128]{1,0:T(1,128)}', space=vmem, size = 0x12000, scoped, tag = 'internal scratch']
  #allocation2 [shape = 'f32[512,128]{1,0:T(8,128)}', space=vmem, size = 0x40000, scoped, tag = 'scratch operand']
  %s0 = inlined_call_operand.vmem [shape: bf16[1024,256], index: 0, kind: input, shape index: {}]
  %s1 = inlined_call_operand.hbm [shape: f32[256,128], index: 1, kind: input, shape index: {}]
  %s2 = inlined_call_operand.vmem [shape: f32[1024,1], index: 2, kind: input, shape index: {}]
  %s3 = inlined_call_operand.hbm [shape: f32[1024,128], index: 3, kind: output, shape index: {}]
  %s4 = sld [smem:[#allocation0]]
  $region57: #{tpu_custom_call.1} parent=0
    _
  %s6 = ssub.s32 1, %s4
  %s7 = scalar_select 0, %s6, %s4
  $region1: #{tpu_custom_call.1} parent=0
    #allocation3 [shape = 'u8[131072]{0}', space=vmem, size = 0x20000, scoped, tag = 'input window, operand 1, single buffered']
    #allocation4 [shape = 's32[2]{0}', space=sflag, size = 0x8, scoped, tag = 'scoped memory for tpu_custom_call.1']
    #allocation5 [shape = 's32[2]{0}', space=sflag, size = 0x8, scoped, tag = 'scoped memory for tpu_custom_call.1']
    #allocation6 [shape = 'u8[524288]{0}', space=vmem, size = 0x80000, scoped, tag = 'output window, operand 0']
    %8 = vsyncpa [#allocation4], 0
    %9 = vsyncpa [#allocation5], 0
    %s10 = scalar_lea.sflag [#allocation5], 1
    %11 = vsyncpa %s10, 0
    loop: start=0, step=1, limit=4
    $region2: #{tpu_custom_call.1} parent=1 // loop_pre_header
      _
    $region3: #{tpu_custom_call.1} parent=1 // loop_header
      %s13 = sphi 0, %s17
      %p14 = scmp.ge.s32.totalorder %s13, 4
      %s20 = sphi 0, %s32
      %s21 = sphi 0, %s28
      %s22 = sphi 0, %s20
      %s23 = sphi 0, %s21
      %s24 = sphi 0, %s22
      %s25 = sphi 0, %s23
      %s37 = sphi 0, %s39
      %s40 = sphi 0, %s37
      %s41 = sphi 0, %s40
      %s57 = sphi 0, %s41
      %s61 = sphi 0, %s61
      %s63 = sphi 0, %s61
      %s64 = sphi 0, %s63
      %s78 = sphi 0, %s64
      %s84 = sphi 0, %s86
      %s87 = sphi 0, %s84
      %s88 = sphi 0, %s87
      %s104 = sphi 0, %s88
      %s110 = sphi 0, %s112
      %s113 = sphi 0, %s110
      %s114 = sphi 0, %s113
      %s130 = sphi 0, %s114
    $region4: #{tpu_custom_call.1} parent=1 // loop_header_branch
      %16 = sbr.rel (%p14) target = $region8
    $region5: #{tpu_custom_call.1} parent=1 // loop_body
      %s18 = ssub.s32 %s13, 1
      %s19 = ssub.s32 %s13, 2
      %s26 = sadd.s32 1, %s21
      %p27 = scmp.ge.s32.totalorder %s26, 1
      %s28 = scalar_select %p27, 0, %s26
      %s29 = sadd.s32 1, %s20
      %s30 = scalar_select %p27, %s29, %s20
      %p31 = scmp.ge.s32.totalorder %s30, 2
      %s32 = scalar_select %p31, 0, %s30
      %s33 = ssub.s32 %s20, %s32
      %s34 = ssub.s32 %s21, %s28
      %s35 = sor.u32 %s33, %s34
      %p36 = scmp.eq.s32.totalorder %s35, 0
      %s38 = sadd.s32 %s37, 1
      %s39 = scalar_select %p36, %s37, %s38
      %p42 = pneg %p36
      %p43 = scmp.eq.s32.totalorder %s13, 1
      %p44 = por %p42, %p43
      %p45 = scmp.ne.s32.totalorder %s37, %s40
      %p46 = scmp.eq.s32.totalorder %s13, 0
      %p47 = por %p45, %p46
      %p48 = scmp.ne.s32.totalorder %s37, %s40
      %p49 = scmp.eq.s32.totalorder %s18, 1
      %p50 = por %p48, %p49
      %p51 = scmp.ne.s32.totalorder %s40, %s41
      %p52 = scmp.eq.s32.totalorder %s18, 0
      %p53 = por %p51, %p52
      %p54 = scmp.ne.s32.totalorder %s40, %s41
      %p55 = scmp.eq.s32.totalorder %s19, 1
      %p56 = por %p54, %p55
      %p58 = scmp.ne.s32.totalorder %s41, %s57
      %p59 = scmp.eq.s32.totalorder %s19, 0
      %p60 = por %p58, %p59
      %s62 = sadd.s32 %s61, 1
      %p65 = scmp.eq.s32.totalorder %s13, 1
      %p66 = scmp.ne.s32.totalorder %s61, %s63
      %p67 = scmp.eq.s32.totalorder %s13, 0
      %p68 = por %p66, %p67
      %p69 = scmp.ne.s32.totalorder %s61, %s63
      %p70 = scmp.eq.s32.totalorder %s18, 1
      %p71 = por %p69, %p70
      %p72 = scmp.ne.s32.totalorder %s63, %s64
      %p73 = scmp.eq.s32.totalorder %s18, 0
      %p74 = por %p72, %p73
      %p75 = scmp.ne.s32.totalorder %s63, %s64
      %p76 = scmp.eq.s32.totalorder %s19, 1
      %p77 = por %p75, %p76
      %p79 = scmp.ne.s32.totalorder %s64, %s78
      %p80 = scmp.eq.s32.totalorder %s19, 0
      %p81 = por %p79, %p80
      %s82 = ssub.s32 %s20, %s32
      %p83 = scmp.eq.s32.totalorder %s82, 0
      %s85 = sadd.s32 %s84, 1
      %s86 = scalar_select %p83, %s84, %s85
      %p89 = pneg %p83
      %p90 = scmp.eq.s32.totalorder %s13, 1
      %p91 = por %p89, %p90
      %p92 = scmp.ne.s32.totalorder %s84, %s87
      %p93 = scmp.eq.s32.totalorder %s13, 0
      %p94 = por %p92, %p93
      %p95 = scmp.ne.s32.totalorder %s84, %s87
      %p96 = scmp.eq.s32.totalorder %s18, 1
      %p97 = por %p95, %p96
      %p98 = scmp.ne.s32.totalorder %s87, %s88
      %p99 = scmp.eq.s32.totalorder %s18, 0
      %p100 = por %p98, %p99
      %p101 = scmp.ne.s32.totalorder %s87, %s88
      %p102 = scmp.eq.s32.totalorder %s19, 1
      %p103 = por %p101, %p102
      %p105 = scmp.ne.s32.totalorder %s88, %s104
      %p106 = scmp.eq.s32.totalorder %s19, 0
      %p107 = por %p105, %p106
      %s108 = ssub.s32 %s20, %s32
      %p109 = scmp.eq.s32.totalorder %s108, 0
      %s111 = sadd.s32 %s110, 1
      %s112 = scalar_select %p109, %s110, %s111
      %p115 = pneg %p109
      %p116 = scmp.eq.s32.totalorder %s13, 1
      %p117 = por %p115, %p116
      %p118 = scmp.ne.s32.totalorder %s110, %s113
      %p119 = scmp.eq.s32.totalorder %s13, 0
      %p120 = por %p118, %p119
      %p121 = scmp.ne.s32.totalorder %s110, %s113
      %p122 = scmp.eq.s32.totalorder %s18, 1
      %p123 = por %p121, %p122
      %p124 = scmp.ne.s32.totalorder %s113, %s114
      %p125 = scmp.eq.s32.totalorder %s18, 0
      %p126 = por %p124, %p125
      %p127 = scmp.ne.s32.totalorder %s113, %s114
      %p128 = scmp.eq.s32.totalorder %s19, 1
      %p129 = por %p127, %p128
      %p131 = scmp.ne.s32.totalorder %s114, %s130
      %p132 = scmp.eq.s32.totalorder %s19, 0
      %p133 = por %p131, %p132
      %p134 = scmp.le.s32.totalorder 1, %s13
      %p135 = scmp.lt.s32.totalorder %s13, 3
      %p136 = pnand %p134, %p135
      %p137 = pneg %p136
      // Predicated region
      $region9: #{tpu_custom_call.1} parent=5 // pred_check
        _
      $region10: #{tpu_custom_call.1} parent=5 // pred_check_branch
        %139 = sbr.rel (%p136) target = $region12
      $region11: #{tpu_custom_call.1} parent=5 // pred_region
        %s140 = ssub.s32 %s13, 1
        // Predicated region
        $region13: #{tpu_custom_call.1} parent=11 // pred_check
          %p141 = pneg %p74
        $region14: #{tpu_custom_call.1} parent=11 // pred_check_branch
          %143 = sbr.rel (%p141) target = $region16
        $region15: #{tpu_custom_call.1} parent=11 // pred_region
          %s145 = ssub.s32 4096, 4096
          %146 = vsyncadd [#allocation4], %s145
          %s147 = sshll.u32 [#allocation3], 4
          %s148 = int_to_ptr.vmem [resolvable:$true] %s147
          %153 = dma.hbm_to_vmem [thread:$0]  %s1, 4096, %s148, [#allocation4], 128, 128, 8
        $region16: #{tpu_custom_call.1} parent=11 // pred_fallthru
          _
      $region12: #{tpu_custom_call.1} parent=5 // pred_fallthru
        _
      %p154 = scmp.lt.s32.totalorder %s13, 2
      // Predicated region
      $region17: #{tpu_custom_call.1} parent=5 // pred_check
        %p155 = pneg %p154
      $region18: #{tpu_custom_call.1} parent=5 // pred_check_branch
        %157 = sbr.rel (%p155) target = $region20
      $region19: #{tpu_custom_call.1} parent=5 // pred_region
        // Predicated region
        $region21: #{tpu_custom_call.1} parent=19 // pred_check
          %p158 = pneg %p47
        $region22: #{tpu_custom_call.1} parent=19 // pred_check_branch
          %160 = sbr.rel (%p158) target = $region24
        $region23: #{tpu_custom_call.1} parent=19 // pred_region
          %s161 = smul.u32 64, %s20
          %s162 = smul.u32 2, %s21
          %p163 = scmp.lt.s32.totalorder %s161, 127
          %s164 = scalar_select %p163, %s161, 127
          %p165 = scmp.lt.s32.totalorder %s162, 1
          %s166 = scalar_select %p165, %s162, 1
          %s167 = smul.addr %s164, 2
          %s168 = sadd.s32 %s166, %s167
          %s169 = smul.addr %s168, 4
          %s170 = scalar_lea.vmem %s0, %s169
          %s171 = smul.u32 64, %s20
          %s172 = smul.u32 2, %s21
        $region24: #{tpu_custom_call.1} parent=19 // pred_fallthru
          _
        // Predicated region
        $region25: #{tpu_custom_call.1} parent=19 // pred_check
          %p173 = pneg %p94
        $region26: #{tpu_custom_call.1} parent=19 // pred_check_branch
          %175 = sbr.rel (%p173) target = $region28
        $region27: #{tpu_custom_call.1} parent=19 // pred_region
          %s176 = smul.u32 64, %s20
          %p177 = scmp.lt.s32.totalorder %s176, 127
          %s178 = scalar_select %p177, %s176, 127
          %s179 = smul.addr %s178, 8
          %s180 = scalar_lea.vmem %s2, %s179
          %s181 = smul.u32 64, %s20
        $region28: #{tpu_custom_call.1} parent=19 // pred_fallthru
          _
      $region20: #{tpu_custom_call.1} parent=5 // pred_fallthru
        _
      %p182 = scmp.le.s32.totalorder 1, %s13
      %p183 = scmp.lt.s32.totalorder %s13, 3
      %p184 = pnand %p182, %p183
      %p185 = pneg %p184
      // Predicated region
      $region29: #{tpu_custom_call.1} parent=5 // pred_check
        _
      $region30: #{tpu_custom_call.1} parent=5 // pred_check_branch
        %187 = sbr.rel (%p184) target = $region32
      $region31: #{tpu_custom_call.1} parent=5 // pred_region
        %s188 = ssub.s32 %s13, 1
        // Predicated region
        $region33: #{tpu_custom_call.1} parent=31 // pred_check
          %p189 = pneg %p74
        $region34: #{tpu_custom_call.1} parent=31 // pred_check_branch
          %191 = sbr.rel (%p189) target = $region36
        $region35: #{tpu_custom_call.1} parent=31 // pred_region
          %192 = dma.done [#allocation4], 4096
        $region36: #{tpu_custom_call.1} parent=31 // pred_fallthru
          _
        %s193 = smul.u32 64, %s22
        %s194 = smul.u32 2, %s23
        %p195 = scmp.lt.s32.totalorder %s193, 127
        %s196 = scalar_select %p195, %s193, 127
        %p197 = scmp.lt.s32.totalorder %s194, 1
        %s198 = scalar_select %p197, %s194, 1
        %s199 = smul.addr %s196, 2
        %s200 = sadd.s32 %s198, %s199
        %s201 = smul.addr %s200, 4
        %s202 = scalar_lea.vmem %s0, %s201
        %p203 = pneg %p53
        %p204 = pneg %p50
        %p205 = pneg %p74
        %p206 = pneg %p71
        %s207 = smul.u32 64, %s22
        %p208 = scmp.lt.s32.totalorder %s207, 127
        %s209 = scalar_select %p208, %s207, 127
        %s210 = smul.addr %s209, 8
        %s211 = scalar_lea.vmem %s2, %s210
        %p212 = pneg %p100
        %p213 = pneg %p97
        %p214 = pneg %p126
        %p215 = pneg %p123
        %s216 = sand.u32 %s113, 1
        %s217 = scalar_lea.sflag [#allocation5], %s216
        %s218 = sand.u32 %s113, 1
        %s219 = smul.addr %s218, 512
        %s220 = scalar_lea.vmem [#allocation6], %s219
        %s221 = smul.u32 64, %s22
        %s222 = smul.u32 2, %s23
        %p223 = scmp.lt.s32.totalorder %s221, 127
        %s224 = scalar_select %p223, %s221, 127
        %p225 = scmp.lt.s32.totalorder %s222, 1
        %s226 = scalar_select %p225, %s222, 1
        %s227 = smul.addr %s224, 2
        %s228 = sadd.s32 %s226, %s227
        %s229 = smul.addr %s228, 4
        %s230 = scalar_lea.vmem %s0, %s229
        %s231 = smul.u32 64, %s22
        %s232 = smul.u32 2, %s23
        %s233 = smul.u32 64, %s22
        %p234 = scmp.lt.s32.totalorder %s233, 127
        %s235 = scalar_select %p234, %s233, 127
        %s236 = smul.addr %s235, 8
        %s237 = scalar_lea.vmem %s2, %s236
        %s238 = smul.u32 64, %s22
        %s239 = smul.u32 64, %s22
        %p241 = scmp.eq.s32.totalorder %s23, 0
        // Predicated region
        $region37: #{tpu_custom_call.1} parent=31 // pred_check
          %p242 = pneg %p241
        $region38: #{tpu_custom_call.1} parent=31 // pred_check_branch
          %244 = sbr.rel (%p242) target = $region40
        $region39: #{tpu_custom_call.1} parent=31 // pred_region
          %245 = vst [vmem:[#allocation2] sm:$0xff] 0.0
          %246 = vst [vmem:[#allocation2 + $0x8] sm:$0xff] 0.0
          %247 = vst [vmem:[#allocation2 + $0x10] sm:$0xff] 0.0
          %248 = vst [vmem:[#allocation2 + $0x18] sm:$0xff] 0.0
          %249 = vst [vmem:[#allocation2 + $0x20] sm:$0xff] 0.0
          %250 = vst [vmem:[#allocation2 + $0x28] sm:$0xff] 0.0
          %251 = vst [vmem:[#allocation2 + $0x30] sm:$0xff] 0.0
          %252 = vst [vmem:[#allocation2 + $0x38] sm:$0xff] 0.0
          %253 = vst [vmem:[#allocation2 + $0x40] sm:$0xff] 0.0
          %254 = vst [vmem:[#allocation2 + $0x48] sm:$0xff] 0.0
          %255 = vst [vmem:[#allocation2 + $0x50] sm:$0xff] 0.0
          %256 = vst [vmem:[#allocation2 + $0x58] sm:$0xff] 0.0
          %257 = vst [vmem:[#allocation2 + $0x60] sm:$0xff] 0.0
          %258 = vst [vmem:[#allocation2 + $0x68] sm:$0xff] 0.0
          %259 = vst [vmem:[#allocation2 + $0x70] sm:$0xff] 0.0
          %260 = vst [vmem:[#allocation2 + $0x78] sm:$0xff] 0.0
          %261 = vst [vmem:[#allocation2 + $0x80] sm:$0xff] 0.0
          %262 = vst [vmem:[#allocation2 + $0x88] sm:$0xff] 0.0
          %263 = vst [vmem:[#allocation2 + $0x90] sm:$0xff] 0.0
          %264 = vst [vmem:[#allocation2 + $0x98] sm:$0xff] 0.0
          %265 = vst [vmem:[#allocation2 + $0xa0] sm:$0xff] 0.0
          %266 = vst [vmem:[#allocation2 + $0xa8] sm:$0xff] 0.0
          %267 = vst [vmem:[#allocation2 + $0xb0] sm:$0xff] 0.0
          %268 = vst [vmem:[#allocation2 + $0xb8] sm:$0xff] 0.0
          %269 = vst [vmem:[#allocation2 + $0xc0] sm:$0xff] 0.0
          %270 = vst [vmem:[#allocation2 + $0xc8] sm:$0xff] 0.0
          %271 = vst [vmem:[#allocation2 + $0xd0] sm:$0xff] 0.0
          %272 = vst [vmem:[#allocation2 + $0xd8] sm:$0xff] 0.0
          %273 = vst [vmem:[#allocation2 + $0xe0] sm:$0xff] 0.0
          %274 = vst [vmem:[#allocation2 + $0xe8] sm:$0xff] 0.0
          %275 = vst [vmem:[#allocation2 + $0xf0] sm:$0xff] 0.0
          %276 = vst [vmem:[#allocation2 + $0xf8] sm:$0xff] 0.0
          %277 = vst [vmem:[#allocation2 + $0x100] sm:$0xff] 0.0
          %278 = vst [vmem:[#allocation2 + $0x108] sm:$0xff] 0.0
          %279 = vst [vmem:[#allocation2 + $0x110] sm:$0xff] 0.0
          %280 = vst [vmem:[#allocation2 + $0x118] sm:$0xff] 0.0
          %281 = vst [vmem:[#allocation2 + $0x120] sm:$0xff] 0.0
          %282 = vst [vmem:[#allocation2 + $0x128] sm:$0xff] 0.0
          %283 = vst [vmem:[#allocation2 + $0x130] sm:$0xff] 0.0
          %284 = vst [vmem:[#allocation2 + $0x138] sm:$0xff] 0.0
          %285 = vst [vmem:[#allocation2 + $0x140] sm:$0xff] 0.0
          %286 = vst [vmem:[#allocation2 + $0x148] sm:$0xff] 0.0
          %287 = vst [vmem:[#allocation2 + $0x150] sm:$0xff] 0.0
          %288 = vst [vmem:[#allocation2 + $0x158] sm:$0xff] 0.0
          %289 = vst [vmem:[#allocation2 + $0x160] sm:$0xff] 0.0
          %290 = vst [vmem:[#allocation2 + $0x168] sm:$0xff] 0.0
          %291 = vst [vmem:[#allocation2 + $0x170] sm:$0xff] 0.0
          %292 = vst [vmem:[#allocation2 + $0x178] sm:$0xff] 0.0
          %293 = vst [vmem:[#allocation2 + $0x180] sm:$0xff] 0.0
          %294 = vst [vmem:[#allocation2 + $0x188] sm:$0xff] 0.0
          %295 = vst [vmem:[#allocation2 + $0x190] sm:$0xff] 0.0
          %296 = vst [vmem:[#allocation2 + $0x198] sm:$0xff] 0.0
          %297 = vst [vmem:[#allocation2 + $0x1a0] sm:$0xff] 0.0
          %298 = vst [vmem:[#allocation2 + $0x1a8] sm:$0xff] 0.0
          %299 = vst [vmem:[#allocation2 + $0x1b0] sm:$0xff] 0.0
          %300 = vst [vmem:[#allocation2 + $0x1b8] sm:$0xff] 0.0
          %301 = vst [vmem:[#allocation2 + $0x1c0] sm:$0xff] 0.0
          %302 = vst [vmem:[#allocation2 + $0x1c8] sm:$0xff] 0.0
          %303 = vst [vmem:[#allocation2 + $0x1d0] sm:$0xff] 0.0
          %304 = vst [vmem:[#allocation2 + $0x1d8] sm:$0xff] 0.0
          %305 = vst [vmem:[#allocation2 + $0x1e0] sm:$0xff] 0.0
          %306 = vst [vmem:[#allocation2 + $0x1e8] sm:$0xff] 0.0
          %307 = vst [vmem:[#allocation2 + $0x1f0] sm:$0xff] 0.0
          %308 = vst [vmem:[#allocation2 + $0x1f8] sm:$0xff] 0.0
        $region40: #{tpu_custom_call.1} parent=31 // pred_fallthru
          _
        %v309 = vld [vmem:[%s230] sm:$0xff]
        %v310 = vld [vmem:[%s230 + $0x8] sm:$0xff]
        %v311 = vld [vmem:[%s230 + $0x10] sm:$0xff]
        %v312 = vld [vmem:[%s230 + $0x18] sm:$0xff]
        %v313 = vld [vmem:[%s230 + $0x20] sm:$0xff]
        %v314 = vld [vmem:[%s230 + $0x28] sm:$0xff]
        %v315 = vld [vmem:[%s230 + $0x30] sm:$0xff]
        %v316 = vld [vmem:[%s230 + $0x38] sm:$0xff]
        %v317 = vld [vmem:[%s230 + $0x40] sm:$0xff]
        %v318 = vld [vmem:[%s230 + $0x48] sm:$0xff]
        %v319 = vld [vmem:[%s230 + $0x50] sm:$0xff]
        %v320 = vld [vmem:[%s230 + $0x58] sm:$0xff]
        %v321 = vld [vmem:[%s230 + $0x60] sm:$0xff]
        %v322 = vld [vmem:[%s230 + $0x68] sm:$0xff]
        %v323 = vld [vmem:[%s230 + $0x70] sm:$0xff]
        %v324 = vld [vmem:[%s230 + $0x78] sm:$0xff]
        %v325 = vld [vmem:[%s230 + $0x80] sm:$0xff]
        %v326 = vld [vmem:[%s230 + $0x88] sm:$0xff]
        %v327 = vld [vmem:[%s230 + $0x90] sm:$0xff]
        %v328 = vld [vmem:[%s230 + $0x98] sm:$0xff]
        %v329 = vld [vmem:[%s230 + $0xa0] sm:$0xff]
        %v330 = vld [vmem:[%s230 + $0xa8] sm:$0xff]
        %v331 = vld [vmem:[%s230 + $0xb0] sm:$0xff]
        %v332 = vld [vmem:[%s230 + $0xb8] sm:$0xff]
        %v333 = vld [vmem:[%s230 + $0xc0] sm:$0xff]
        %v334 = vld [vmem:[%s230 + $0xc8] sm:$0xff]
        %v335 = vld [vmem:[%s230 + $0xd0] sm:$0xff]
        %v336 = vld [vmem:[%s230 + $0xd8] sm:$0xff]
        %v337 = vld [vmem:[%s230 + $0xe0] sm:$0xff]
        %v338 = vld [vmem:[%s230 + $0xe8] sm:$0xff]
        %v339 = vld [vmem:[%s230 + $0xf0] sm:$0xff]
        %v340 = vld [vmem:[%s230 + $0xf8] sm:$0xff]
        %v341 = vld [vmem:[%s230 + $0x100] sm:$0xff]
        %v342 = vld [vmem:[%s230 + $0x108] sm:$0xff]
        %v343 = vld [vmem:[%s230 + $0x110] sm:$0xff]
        %v344 = vld [vmem:[%s230 + $0x118] sm:$0xff]
        %v345 = vld [vmem:[%s230 + $0x120] sm:$0xff]
        %v346 = vld [vmem:[%s230 + $0x128] sm:$0xff]
        %v347 = vld [vmem:[%s230 + $0x130] sm:$0xff]
        %v348 = vld [vmem:[%s230 + $0x138] sm:$0xff]
        %v349 = vld [vmem:[%s230 + $0x140] sm:$0xff]
        %v350 = vld [vmem:[%s230 + $0x148] sm:$0xff]
        %v351 = vld [vmem:[%s230 + $0x150] sm:$0xff]
        %v352 = vld [vmem:[%s230 + $0x158] sm:$0xff]
        %v353 = vld [vmem:[%s230 + $0x160] sm:$0xff]
        %v354 = vld [vmem:[%s230 + $0x168] sm:$0xff]
        %v355 = vld [vmem:[%s230 + $0x170] sm:$0xff]
        %v356 = vld [vmem:[%s230 + $0x178] sm:$0xff]
        %v357 = vld [vmem:[%s230 + $0x180] sm:$0xff]
        %v358 = vld [vmem:[%s230 + $0x188] sm:$0xff]
        %v359 = vld [vmem:[%s230 + $0x190] sm:$0xff]
        %v360 = vld [vmem:[%s230 + $0x198] sm:$0xff]
        %v361 = vld [vmem:[%s230 + $0x1a0] sm:$0xff]
        %v362 = vld [vmem:[%s230 + $0x1a8] sm:$0xff]
        %v363 = vld [vmem:[%s230 + $0x1b0] sm:$0xff]
        %v364 = vld [vmem:[%s230 + $0x1b8] sm:$0xff]
        %v365 = vld [vmem:[%s230 + $0x1c0] sm:$0xff]
        %v366 = vld [vmem:[%s230 + $0x1c8] sm:$0xff]
        %v367 = vld [vmem:[%s230 + $0x1d0] sm:$0xff]
        %v368 = vld [vmem:[%s230 + $0x1d8] sm:$0xff]
        %v369 = vld [vmem:[%s230 + $0x1e0] sm:$0xff]
        %v370 = vld [vmem:[%s230 + $0x1e8] sm:$0xff]
        %v371 = vld [vmem:[%s230 + $0x1f0] sm:$0xff]
        %v372 = vld [vmem:[%s230 + $0x1f8] sm:$0xff]
        %s373 = smul.u32 %s23, 256
        %s374 = scalar_lea.vmem [#allocation3], %s373
        %v375 = vld [vmem:[%s374] sm:$0xff]
        %v376 = vld [vmem:[%s374 + $0x8] sm:$0xff]
        %v377 = vld [vmem:[%s374 + $0x10] sm:$0xff]
        %v378 = vld [vmem:[%s374 + $0x18] sm:$0xff]
        %v379 = vld [vmem:[%s374 + $0x20] sm:$0xff]
        %v380 = vld [vmem:[%s374 + $0x28] sm:$0xff]
        %v381 = vld [vmem:[%s374 + $0x30] sm:$0xff]
        %v382 = vld [vmem:[%s374 + $0x38] sm:$0xff]
        %v383 = vld [vmem:[%s374 + $0x40] sm:$0xff]
        %v384 = vld [vmem:[%s374 + $0x48] sm:$0xff]
        %v385 = vld [vmem:[%s374 + $0x50] sm:$0xff]
        %v386 = vld [vmem:[%s374 + $0x58] sm:$0xff]
        %v387 = vld [vmem:[%s374 + $0x60] sm:$0xff]
        %v388 = vld [vmem:[%s374 + $0x68] sm:$0xff]
        %v389 = vld [vmem:[%s374 + $0x70] sm:$0xff]
        %v390 = vld [vmem:[%s374 + $0x78] sm:$0xff]
        %v391 = vld [vmem:[%s374 + $0x80] sm:$0xff]
        %v392 = vld [vmem:[%s374 + $0x88] sm:$0xff]
        %v393 = vld [vmem:[%s374 + $0x90] sm:$0xff]
        %v394 = vld [vmem:[%s374 + $0x98] sm:$0xff]
        %v395 = vld [vmem:[%s374 + $0xa0] sm:$0xff]
        %v396 = vld [vmem:[%s374 + $0xa8] sm:$0xff]
        %v397 = vld [vmem:[%s374 + $0xb0] sm:$0xff]
        %v398 = vld [vmem:[%s374 + $0xb8] sm:$0xff]
        %v399 = vld [vmem:[%s374 + $0xc0] sm:$0xff]
        %v400 = vld [vmem:[%s374 + $0xc8] sm:$0xff]
        %v401 = vld [vmem:[%s374 + $0xd0] sm:$0xff]
        %v402 = vld [vmem:[%s374 + $0xd8] sm:$0xff]
        %v403 = vld [vmem:[%s374 + $0xe0] sm:$0xff]
        %v404 = vld [vmem:[%s374 + $0xe8] sm:$0xff]
        %v405 = vld [vmem:[%s374 + $0xf0] sm:$0xff]
        %v406 = vld [vmem:[%s374 + $0xf8] sm:$0xff]
        %v407 = vpack.c.bf16 %v376, %v375
        %v408 = vpack.c.bf16 %v378, %v377
        %v409 = vpack.c.bf16 %v380, %v379
        %v410 = vpack.c.bf16 %v382, %v381
        %v411 = vpack.c.bf16 %v384, %v383
        %v412 = vpack.c.bf16 %v386, %v385
        %v413 = vpack.c.bf16 %v388, %v387
        %v414 = vpack.c.bf16 %v390, %v389
        %v415 = vpack.c.bf16 %v392, %v391
        %v416 = vpack.c.bf16 %v394, %v393
        %v417 = vpack.c.bf16 %v396, %v395
        %v418 = vpack.c.bf16 %v398, %v397
        %v419 = vpack.c.bf16 %v400, %v399
        %v420 = vpack.c.bf16 %v402, %v401
        %v421 = vpack.c.bf16 %v404, %v403
        %v422 = vpack.c.bf16 %v406, %v405
        %v423 = vld [vmem:[#allocation2] sm:$0xff]
        %v424 = vld [vmem:[#allocation2 + $0x8] sm:$0xff]
        %v425 = vld [vmem:[#allocation2 + $0x10] sm:$0xff]
        %v426 = vld [vmem:[#allocation2 + $0x18] sm:$0xff]
        %v427 = vld [vmem:[#allocation2 + $0x20] sm:$0xff]
        %v428 = vld [vmem:[#allocation2 + $0x28] sm:$0xff]
        %v429 = vld [vmem:[#allocation2 + $0x30] sm:$0xff]
        %v430 = vld [vmem:[#allocation2 + $0x38] sm:$0xff]
        %v431 = vld [vmem:[#allocation2 + $0x40] sm:$0xff]
        %v432 = vld [vmem:[#allocation2 + $0x48] sm:$0xff]
        %v433 = vld [vmem:[#allocation2 + $0x50] sm:$0xff]
        %v434 = vld [vmem:[#allocation2 + $0x58] sm:$0xff]
        %v435 = vld [vmem:[#allocation2 + $0x60] sm:$0xff]
        %v436 = vld [vmem:[#allocation2 + $0x68] sm:$0xff]
        %v437 = vld [vmem:[#allocation2 + $0x70] sm:$0xff]
        %v438 = vld [vmem:[#allocation2 + $0x78] sm:$0xff]
        %v439 = vld [vmem:[#allocation2 + $0x80] sm:$0xff]
        %v440 = vld [vmem:[#allocation2 + $0x88] sm:$0xff]
        %v441 = vld [vmem:[#allocation2 + $0x90] sm:$0xff]
        %v442 = vld [vmem:[#allocation2 + $0x98] sm:$0xff]
        %v443 = vld [vmem:[#allocation2 + $0xa0] sm:$0xff]
        %v444 = vld [vmem:[#allocation2 + $0xa8] sm:$0xff]
        %v445 = vld [vmem:[#allocation2 + $0xb0] sm:$0xff]
        %v446 = vld [vmem:[#allocation2 + $0xb8] sm:$0xff]
        %v447 = vld [vmem:[#allocation2 + $0xc0] sm:$0xff]
        %v448 = vld [vmem:[#allocation2 + $0xc8] sm:$0xff]
        %v449 = vld [vmem:[#allocation2 + $0xd0] sm:$0xff]
        %v450 = vld [vmem:[#allocation2 + $0xd8] sm:$0xff]
        %v451 = vld [vmem:[#allocation2 + $0xe0] sm:$0xff]
        %v452 = vld [vmem:[#allocation2 + $0xe8] sm:$0xff]
        %v453 = vld [vmem:[#allocation2 + $0xf0] sm:$0xff]
        %v454 = vld [vmem:[#allocation2 + $0xf8] sm:$0xff]
        %v455 = vld [vmem:[#allocation2 + $0x100] sm:$0xff]
        %v456 = vld [vmem:[#allocation2 + $0x108] sm:$0xff]
        %v457 = vld [vmem:[#allocation2 + $0x110] sm:$0xff]
        %v458 = vld [vmem:[#allocation2 + $0x118] sm:$0xff]
        %v459 = vld [vmem:[#allocation2 + $0x120] sm:$0xff]
        %v460 = vld [vmem:[#allocation2 + $0x128] sm:$0xff]
        %v461 = vld [vmem:[#allocation2 + $0x130] sm:$0xff]
        %v462 = vld [vmem:[#allocation2 + $0x138] sm:$0xff]
        %v463 = vld [vmem:[#allocation2 + $0x140] sm:$0xff]
        %v464 = vld [vmem:[#allocation2 + $0x148] sm:$0xff]
        %v465 = vld [vmem:[#allocation2 + $0x150] sm:$0xff]
        %v466 = vld [vmem:[#allocation2 + $0x158] sm:$0xff]
        %v467 = vld [vmem:[#allocation2 + $0x160] sm:$0xff]
        %v468 = vld [vmem:[#allocation2 + $0x168] sm:$0xff]
        %v469 = vld [vmem:[#allocation2 + $0x170] sm:$0xff]
        %v470 = vld [vmem:[#allocation2 + $0x178] sm:$0xff]
        %v471 = vld [vmem:[#allocation2 + $0x180] sm:$0xff]
        %v472 = vld [vmem:[#allocation2 + $0x188] sm:$0xff]
        %v473 = vld [vmem:[#allocation2 + $0x190] sm:$0xff]
        %v474 = vld [vmem:[#allocation2 + $0x198] sm:$0xff]
        %v475 = vld [vmem:[#allocation2 + $0x1a0] sm:$0xff]
        %v476 = vld [vmem:[#allocation2 + $0x1a8] sm:$0xff]
        %v477 = vld [vmem:[#allocation2 + $0x1b0] sm:$0xff]
        %v478 = vld [vmem:[#allocation2 + $0x1b8] sm:$0xff]
        %v479 = vld [vmem:[#allocation2 + $0x1c0] sm:$0xff]
        %v480 = vld [vmem:[#allocation2 + $0x1c8] sm:$0xff]
        %v481 = vld [vmem:[#allocation2 + $0x1d0] sm:$0xff]
        %v482 = vld [vmem:[#allocation2 + $0x1d8] sm:$0xff]
        %v483 = vld [vmem:[#allocation2 + $0x1e0] sm:$0xff]
        %v484 = vld [vmem:[#allocation2 + $0x1e8] sm:$0xff]
        %v485 = vld [vmem:[#allocation2 + $0x1f0] sm:$0xff]
        %v486 = vld [vmem:[#allocation2 + $0x1f8] sm:$0xff]
        %v551 = vunpack.c.l.b16 %v309
        %v552 = vunpack.c.h.b16 %v309
        %v553 = vunpack.c.l.b16 %v310
        %v554 = vunpack.c.h.b16 %v310
        %v555 = vunpack.c.l.b16 %v311
        %v556 = vunpack.c.h.b16 %v311
        %v557 = vunpack.c.l.b16 %v312
        %v558 = vunpack.c.h.b16 %v312
        %v559 = vunpack.c.l.b16 %v313
        %v560 = vunpack.c.h.b16 %v313
        %v561 = vunpack.c.l.b16 %v314
        %v562 = vunpack.c.h.b16 %v314
        %v563 = vunpack.c.l.b16 %v315
        %v564 = vunpack.c.h.b16 %v315
        %v565 = vunpack.c.l.b16 %v316
        %v566 = vunpack.c.h.b16 %v316
        %v567 = vunpack.c.l.b16 %v317
        %v568 = vunpack.c.h.b16 %v317
        %v569 = vunpack.c.l.b16 %v318
        %v570 = vunpack.c.h.b16 %v318
        %v571 = vunpack.c.l.b16 %v319
        %v572 = vunpack.c.h.b16 %v319
        %v573 = vunpack.c.l.b16 %v320
        %v574 = vunpack.c.h.b16 %v320
        %v575 = vunpack.c.l.b16 %v321
        %v576 = vunpack.c.h.b16 %v321
        %v577 = vunpack.c.l.b16 %v322
        %v578 = vunpack.c.h.b16 %v322
        %v579 = vunpack.c.l.b16 %v323
        %v580 = vunpack.c.h.b16 %v323
        %v581 = vunpack.c.l.b16 %v324
        %v582 = vunpack.c.h.b16 %v324
        %v583 = vunpack.c.l.b16 %v325
        %v584 = vunpack.c.h.b16 %v325
        %v585 = vunpack.c.l.b16 %v326
        %v586 = vunpack.c.h.b16 %v326
        %v587 = vunpack.c.l.b16 %v327
        %v588 = vunpack.c.h.b16 %v327
        %v589 = vunpack.c.l.b16 %v328
        %v590 = vunpack.c.h.b16 %v328
        %v591 = vunpack.c.l.b16 %v329
        %v592 = vunpack.c.h.b16 %v329
        %v593 = vunpack.c.l.b16 %v330
        %v594 = vunpack.c.h.b16 %v330
        %v595 = vunpack.c.l.b16 %v331
        %v596 = vunpack.c.h.b16 %v331
        %v597 = vunpack.c.l.b16 %v332
        %v598 = vunpack.c.h.b16 %v332
        %v599 = vunpack.c.l.b16 %v333
        %v600 = vunpack.c.h.b16 %v333
        %v601 = vunpack.c.l.b16 %v334
        %v602 = vunpack.c.h.b16 %v334
        %v603 = vunpack.c.l.b16 %v335
        %v604 = vunpack.c.h.b16 %v335
        %v605 = vunpack.c.l.b16 %v336
        %v606 = vunpack.c.h.b16 %v336
        %v607 = vunpack.c.l.b16 %v337
        %v608 = vunpack.c.h.b16 %v337
        %v609 = vunpack.c.l.b16 %v338
        %v610 = vunpack.c.h.b16 %v338
        %v611 = vunpack.c.l.b16 %v339
        %v612 = vunpack.c.h.b16 %v339
        %v613 = vunpack.c.l.b16 %v340
        %v614 = vunpack.c.h.b16 %v340
        %v615 = vunpack.c.l.b16 %v341
        %v616 = vunpack.c.h.b16 %v341
        %v617 = vunpack.c.l.b16 %v342
        %v618 = vunpack.c.h.b16 %v342
        %v619 = vunpack.c.l.b16 %v343
        %v620 = vunpack.c.h.b16 %v343
        %v621 = vunpack.c.l.b16 %v344
        %v622 = vunpack.c.h.b16 %v344
        %v623 = vunpack.c.l.b16 %v345
        %v624 = vunpack.c.h.b16 %v345
        %v625 = vunpack.c.l.b16 %v346
        %v626 = vunpack.c.h.b16 %v346
        %v627 = vunpack.c.l.b16 %v347
        %v628 = vunpack.c.h.b16 %v347
        %v629 = vunpack.c.l.b16 %v348
        %v630 = vunpack.c.h.b16 %v348
        %v631 = vunpack.c.l.b16 %v349
        %v632 = vunpack.c.h.b16 %v349
        %v633 = vunpack.c.l.b16 %v350
        %v634 = vunpack.c.h.b16 %v350
        %v635 = vunpack.c.l.b16 %v351
        %v636 = vunpack.c.h.b16 %v351
        %v637 = vunpack.c.l.b16 %v352
        %v638 = vunpack.c.h.b16 %v352
        %v639 = vunpack.c.l.b16 %v353
        %v640 = vunpack.c.h.b16 %v353
        %v641 = vunpack.c.l.b16 %v354
        %v642 = vunpack.c.h.b16 %v354
        %v643 = vunpack.c.l.b16 %v355
        %v644 = vunpack.c.h.b16 %v355
        %v645 = vunpack.c.l.b16 %v356
        %v646 = vunpack.c.h.b16 %v356
        %v647 = vunpack.c.l.b16 %v357
        %v648 = vunpack.c.h.b16 %v357
        %v649 = vunpack.c.l.b16 %v358
        %v650 = vunpack.c.h.b16 %v358
        %v651 = vunpack.c.l.b16 %v359
        %v652 = vunpack.c.h.b16 %v359
        %v653 = vunpack.c.l.b16 %v360
        %v654 = vunpack.c.h.b16 %v360
        %v655 = vunpack.c.l.b16 %v361
        %v656 = vunpack.c.h.b16 %v361
        %v657 = vunpack.c.l.b16 %v362
        %v658 = vunpack.c.h.b16 %v362
        %v659 = vunpack.c.l.b16 %v363
        %v660 = vunpack.c.h.b16 %v363
        %v661 = vunpack.c.l.b16 %v364
        %v662 = vunpack.c.h.b16 %v364
        %v663 = vunpack.c.l.b16 %v365
        %v664 = vunpack.c.h.b16 %v365
        %v665 = vunpack.c.l.b16 %v366
        %v666 = vunpack.c.h.b16 %v366
        %v667 = vunpack.c.l.b16 %v367
        %v668 = vunpack.c.h.b16 %v367
        %v669 = vunpack.c.l.b16 %v368
        %v670 = vunpack.c.h.b16 %v368
        %v671 = vunpack.c.l.b16 %v369
        %v672 = vunpack.c.h.b16 %v369
        %v673 = vunpack.c.l.b16 %v370
        %v674 = vunpack.c.h.b16 %v370
        %v675 = vunpack.c.l.b16 %v371
        %v676 = vunpack.c.h.b16 %v371
        %v677 = vunpack.c.l.b16 %v372
        %v678 = vunpack.c.h.b16 %v372
        %v679 = vpack.c.b16 %v553, %v551
        %v680 = vpack.c.b16 %v554, %v552
        %v681 = vpack.c.b16 %v557, %v555
        %v682 = vpack.c.b16 %v558, %v556
        %v683 = vpack.c.b16 %v561, %v559
        %v684 = vpack.c.b16 %v562, %v560
        %v685 = vpack.c.b16 %v565, %v563
        %v686 = vpack.c.b16 %v566, %v564
        %v687 = vpack.c.b16 %v569, %v567
        %v688 = vpack.c.b16 %v570, %v568
        %v689 = vpack.c.b16 %v573, %v571
        %v690 = vpack.c.b16 %v574, %v572
        %v691 = vpack.c.b16 %v577, %v575
        %v692 = vpack.c.b16 %v578, %v576
        %v693 = vpack.c.b16 %v581, %v579
        %v694 = vpack.c.b16 %v582, %v580
        %v695 = vpack.c.b16 %v585, %v583
        %v696 = vpack.c.b16 %v586, %v584
        %v697 = vpack.c.b16 %v589, %v587
        %v698 = vpack.c.b16 %v590, %v588
        %v699 = vpack.c.b16 %v593, %v591
        %v700 = vpack.c.b16 %v594, %v592
        %v701 = vpack.c.b16 %v597, %v595
        %v702 = vpack.c.b16 %v598, %v596
        %v703 = vpack.c.b16 %v601, %v599
        %v704 = vpack.c.b16 %v602, %v600
        %v705 = vpack.c.b16 %v605, %v603
        %v706 = vpack.c.b16 %v606, %v604
        %v707 = vpack.c.b16 %v609, %v607
        %v708 = vpack.c.b16 %v610, %v608
        %v709 = vpack.c.b16 %v613, %v611
        %v710 = vpack.c.b16 %v614, %v612
        %v711 = vpack.c.b16 %v617, %v615
        %v712 = vpack.c.b16 %v618, %v616
        %v713 = vpack.c.b16 %v621, %v619
        %v714 = vpack.c.b16 %v622, %v620
        %v715 = vpack.c.b16 %v625, %v623
        %v716 = vpack.c.b16 %v626, %v624
        %v717 = vpack.c.b16 %v629, %v627
        %v718 = vpack.c.b16 %v630, %v628
        %v719 = vpack.c.b16 %v633, %v631
        %v720 = vpack.c.b16 %v634, %v632
        %v721 = vpack.c.b16 %v637, %v635
        %v722 = vpack.c.b16 %v638, %v636
        %v723 = vpack.c.b16 %v641, %v639
        %v724 = vpack.c.b16 %v642, %v640
        %v725 = vpack.c.b16 %v645, %v643
        %v726 = vpack.c.b16 %v646, %v644
        %v727 = vpack.c.b16 %v649, %v647
        %v728 = vpack.c.b16 %v650, %v648
        %v729 = vpack.c.b16 %v653, %v651
        %v730 = vpack.c.b16 %v654, %v652
        %v731 = vpack.c.b16 %v657, %v655
        %v732 = vpack.c.b16 %v658, %v656
        %v733 = vpack.c.b16 %v661, %v659
        %v734 = vpack.c.b16 %v662, %v660
        %v735 = vpack.c.b16 %v665, %v663
        %v736 = vpack.c.b16 %v666, %v664
        %v737 = vpack.c.b16 %v669, %v667
        %v738 = vpack.c.b16 %v670, %v668
        %v739 = vpack.c.b16 %v673, %v671
        %v740 = vpack.c.b16 %v674, %v672
        %v741 = vpack.c.b16 %v677, %v675
        %v742 = vpack.c.b16 %v678, %v676
        %807 = vmatprep.subr.bf16.mxu0 0
        %808 = vmatpush1.bf16.msra.mxu0 %v407
        %809 = vmatprep.subr.bf16.mxu0 0
        %810 = vmatpush1.bf16.msra.mxu0 %v408
        %811 = vmatprep.subr.bf16.mxu0 0
        %812 = vmatpush1.bf16.msra.mxu0 %v409
        %813 = vmatprep.subr.bf16.mxu0 0
        %814 = vmatpush1.bf16.msra.mxu0 %v410
        %815 = vmatprep.subr.bf16.mxu0 0
        %816 = vmatpush1.bf16.msra.mxu0 %v411
        %817 = vmatprep.subr.bf16.mxu0 0
        %818 = vmatpush1.bf16.msra.mxu0 %v412
        %819 = vmatprep.subr.bf16.mxu0 0
        %820 = vmatpush1.bf16.msra.mxu0 %v413
        %821 = vmatprep.subr.bf16.mxu0 0
        %822 = vmatpush1.bf16.msra.mxu0 %v414
        %823 = vmatprep.subr.bf16.mxu0 0
        %824 = vmatpush1.bf16.msra.mxu0 %v415
        %825 = vmatprep.subr.bf16.mxu0 0
        %826 = vmatpush1.bf16.msra.mxu0 %v416
        %827 = vmatprep.subr.bf16.mxu0 0
        %828 = vmatpush1.bf16.msra.mxu0 %v417
        %829 = vmatprep.subr.bf16.mxu0 0
        %830 = vmatpush1.bf16.msra.mxu0 %v418
        %831 = vmatprep.subr.bf16.mxu0 0
        %832 = vmatpush1.bf16.msra.mxu0 %v419
        %833 = vmatprep.subr.bf16.mxu0 0
        %834 = vmatpush1.bf16.msra.mxu0 %v420
        %835 = vmatprep.subr.bf16.mxu0 0
        %836 = vmatpush1.bf16.msra.mxu0 %v421
        %837 = vmatprep.subr.bf16.mxu0 0
        %838 = vmatpush1.bf16.msra.mxu0 %v422
        %839 = vmatprep.mubr.bf16.mxu0 %v680
        %840 = vmatmul.mubr.bf16.gmra.mrb[0].mxu0 %v679
        %v841 = vpop.f32.mrb[0].mxu0
        %v842 = vadd.f32 0.0, %v841
        %v843 = vpop.f32.mrb[0].mxu0
        %v844 = vpop.f32.mrb[0].mxu0
        %v845 = vadd.f32 0.0, %v844
        %v846 = vpop.f32.mrb[0].mxu0
        %847 = vmatprep.mubr.bf16.mxu0 %v682
        %848 = vmatmul.mubr.bf16.gmra.mrb[0].mxu0 %v681
        %v849 = vpop.f32.mrb[0].mxu0
        %v850 = vadd.f32 0.0, %v849
        %v851 = vpop.f32.mrb[0].mxu0
        %v852 = vpop.f32.mrb[0].mxu0
        %v853 = vadd.f32 0.0, %v852
        %v854 = vpop.f32.mrb[0].mxu0
        %855 = vmatprep.mubr.bf16.mxu0 %v684
        %856 = vmatmul.mubr.bf16.gmra.mrb[0].mxu0 %v683
        %v857 = vpop.f32.mrb[0].mxu0
        %v858 = vadd.f32 0.0, %v857
        %v859 = vpop.f32.mrb[0].mxu0
        %v860 = vpop.f32.mrb[0].mxu0
        %v861 = vadd.f32 0.0, %v860
        %v862 = vpop.f32.mrb[0].mxu0
        %863 = vmatprep.mubr.bf16.mxu0 %v686
        %864 = vmatmul.mubr.bf16.gmra.mrb[0].mxu0 %v685
        %v865 = vpop.f32.mrb[0].mxu0
        %v866 = vadd.f32 0.0, %v865
        %v867 = vpop.f32.mrb[0].mxu0
        %v868 = vpop.f32.mrb[0].mxu0
        %v869 = vadd.f32 0.0, %v868
        %v870 = vpop.f32.mrb[0].mxu0
        %871 = vmatprep.mubr.bf16.mxu0 %v688
        %872 = vmatmul.mubr.bf16.gmra.mrb[0].mxu0 %v687
        %v873 = vpop.f32.mrb[0].mxu0
        %v874 = vadd.f32 0.0, %v873
        %v875 = vpop.f32.mrb[0].mxu0
        %v876 = vpop.f32.mrb[0].mxu0
        %v877 = vadd.f32 0.0, %v876
        %v878 = vpop.f32.mrb[0].mxu0
        %879 = vmatprep.mubr.bf16.mxu0 %v690
        %880 = vmatmul.mubr.bf16.gmra.mrb[0].mxu0 %v689
        %v881 = vpop.f32.mrb[0].mxu0
        %v882 = vadd.f32 0.0, %v881
        %v883 = vpop.f32.mrb[0].mxu0
        %v884 = vpop.f32.mrb[0].mxu0
        %v885 = vadd.f32 0.0, %v884
        %v886 = vpop.f32.mrb[0].mxu0
        %887 = vmatprep.mubr.bf16.mxu0 %v692
        %888 = vmatmul.mubr.bf16.gmra.mrb[0].mxu0 %v691
        %v889 = vpop.f32.mrb[0].mxu0
        %v890 = vadd.f32 0.0, %v889
        %v891 = vpop.f32.mrb[0].mxu0
        %v892 = vpop.f32.mrb[0].mxu0
        %v893 = vadd.f32 0.0, %v892
        %v894 = vpop.f32.mrb[0].mxu0
        %895 = vmatprep.mubr.bf16.mxu0 %v694
        %896 = vmatmul.mubr.bf16.gmra.mrb[0].mxu0 %v693
        %v897 = vpop.f32.mrb[0].mxu0
        %v898 = vadd.f32 0.0, %v897
        %v899 = vpop.f32.mrb[0].mxu0
        %v900 = vpop.f32.mrb[0].mxu0
        %v901 = vadd.f32 0.0, %v900
        %v902 = vpop.f32.mrb[0].mxu0
        %903 = vmatprep.mubr.bf16.mxu0 %v696
        %904 = vmatmul.mubr.bf16.gmra.mrb[0].mxu0 %v695
        %v905 = vpop.f32.mrb[0].mxu0
        %v906 = vadd.f32 0.0, %v905
        %v907 = vpop.f32.mrb[0].mxu0
        %v908 = vpop.f32.mrb[0].mxu0
        %v909 = vadd.f32 0.0, %v908
        %v910 = vpop.f32.mrb[0].mxu0
        %911 = vmatprep.mubr.bf16.mxu0 %v698
        %912 = vmatmul.mubr.bf16.gmra.mrb[0].mxu0 %v697
        %v913 = vpop.f32.mrb[0].mxu0
        %v914 = vadd.f32 0.0, %v913
        %v915 = vpop.f32.mrb[0].mxu0
        %v916 = vpop.f32.mrb[0].mxu0
        %v917 = vadd.f32 0.0, %v916
        %v918 = vpop.f32.mrb[0].mxu0
        %919 = vmatprep.mubr.bf16.mxu0 %v700
        %920 = vmatmul.mubr.bf16.gmra.mrb[0].mxu0 %v699
        %v921 = vpop.f32.mrb[0].mxu0
        %v922 = vadd.f32 0.0, %v921
        %v923 = vpop.f32.mrb[0].mxu0
        %v924 = vpop.f32.mrb[0].mxu0
        %v925 = vadd.f32 0.0, %v924
        %v926 = vpop.f32.mrb[0].mxu0
        %927 = vmatprep.mubr.bf16.mxu0 %v702
        %928 = vmatmul.mubr.bf16.gmra.mrb[0].mxu0 %v701
        %v929 = vpop.f32.mrb[0].mxu0
        %v930 = vadd.f32 0.0, %v929
        %v931 = vpop.f32.mrb[0].mxu0
        %v932 = vpop.f32.mrb[0].mxu0
        %v933 = vadd.f32 0.0, %v932
        %v934 = vpop.f32.mrb[0].mxu0
        %935 = vmatprep.mubr.bf16.mxu0 %v704
        %936 = vmatmul.mubr.bf16.gmra.mrb[0].mxu0 %v703
        %v937 = vpop.f32.mrb[0].mxu0
        %v938 = vadd.f32 0.0, %v937
        %v939 = vpop.f32.mrb[0].mxu0
        %v940 = vpop.f32.mrb[0].mxu0
        %v941 = vadd.f32 0.0, %v940
        %v942 = vpop.f32.mrb[0].mxu0
        %943 = vmatprep.mubr.bf16.mxu0 %v706
        %944 = vmatmul.mubr.bf16.gmra.mrb[0].mxu0 %v705
        %v945 = vpop.f32.mrb[0].mxu0
        %v946 = vadd.f32 0.0, %v945
        %v947 = vpop.f32.mrb[0].mxu0
        %v948 = vpop.f32.mrb[0].mxu0
        %v949 = vadd.f32 0.0, %v948
        %v950 = vpop.f32.mrb[0].mxu0
        %951 = vmatprep.mubr.bf16.mxu0 %v708
        %952 = vmatmul.mubr.bf16.gmra.mrb[0].mxu0 %v707
        %v953 = vpop.f32.mrb[0].mxu0
        %v954 = vadd.f32 0.0, %v953
        %v955 = vpop.f32.mrb[0].mxu0
        %v956 = vpop.f32.mrb[0].mxu0
        %v957 = vadd.f32 0.0, %v956
        %v958 = vpop.f32.mrb[0].mxu0
        %959 = vmatprep.mubr.bf16.mxu0 %v710
        %960 = vmatmul.mubr.bf16.gmra.mrb[0].mxu0 %v709
        %v961 = vpop.f32.mrb[0].mxu0
        %v962 = vadd.f32 0.0, %v961
        %v963 = vpop.f32.mrb[0].mxu0
        %v964 = vpop.f32.mrb[0].mxu0
        %v965 = vadd.f32 0.0, %v964
        %v966 = vpop.f32.mrb[0].mxu0
        %967 = vmatprep.mubr.bf16.mxu0 %v712
        %968 = vmatmul.mubr.bf16.gmra.mrb[0].mxu0 %v711
        %v969 = vpop.f32.mrb[0].mxu0
        %v970 = vadd.f32 0.0, %v969
        %v971 = vpop.f32.mrb[0].mxu0
        %v972 = vpop.f32.mrb[0].mxu0
        %v973 = vadd.f32 0.0, %v972
        %v974 = vpop.f32.mrb[0].mxu0
        %975 = vmatprep.mubr.bf16.mxu0 %v714
        %976 = vmatmul.mubr.bf16.gmra.mrb[0].mxu0 %v713
        %v977 = vpop.f32.mrb[0].mxu0
        %v978 = vadd.f32 0.0, %v977
        %v979 = vpop.f32.mrb[0].mxu0
        %v980 = vpop.f32.mrb[0].mxu0
        %v981 = vadd.f32 0.0, %v980
        %v982 = vpop.f32.mrb[0].mxu0
        %983 = vmatprep.mubr.bf16.mxu0 %v716
        %984 = vmatmul.mubr.bf16.gmra.mrb[0].mxu0 %v715
        %v985 = vpop.f32.mrb[0].mxu0
        %v986 = vadd.f32 0.0, %v985
        %v987 = vpop.f32.mrb[0].mxu0
        %v988 = vpop.f32.mrb[0].mxu0
        %v989 = vadd.f32 0.0, %v988
        %v990 = vpop.f32.mrb[0].mxu0
        %991 = vmatprep.mubr.bf16.mxu0 %v718
        %992 = vmatmul.mubr.bf16.gmra.mrb[0].mxu0 %v717
        %v993 = vpop.f32.mrb[0].mxu0
        %v994 = vadd.f32 0.0, %v993
        %v995 = vpop.f32.mrb[0].mxu0
        %v996 = vpop.f32.mrb[0].mxu0
        %v997 = vadd.f32 0.0, %v996
        %v998 = vpop.f32.mrb[0].mxu0
        %999 = vmatprep.mubr.bf16.mxu0 %v720
        %1000 = vmatmul.mubr.bf16.gmra.mrb[0].mxu0 %v719
        %v1001 = vpop.f32.mrb[0].mxu0
        %v1002 = vadd.f32 0.0, %v1001
        %v1003 = vpop.f32.mrb[0].mxu0
        %v1004 = vpop.f32.mrb[0].mxu0
        %v1005 = vadd.f32 0.0, %v1004
        %v1006 = vpop.f32.mrb[0].mxu0
        %1007 = vmatprep.mubr.bf16.mxu0 %v722
        %1008 = vmatmul.mubr.bf16.gmra.mrb[0].mxu0 %v721
        %v1009 = vpop.f32.mrb[0].mxu0
        %v1010 = vadd.f32 0.0, %v1009
        %v1011 = vpop.f32.mrb[0].mxu0
        %v1012 = vpop.f32.mrb[0].mxu0
        %v1013 = vadd.f32 0.0, %v1012
        %v1014 = vpop.f32.mrb[0].mxu0
        %1015 = vmatprep.mubr.bf16.mxu0 %v724
        %1016 = vmatmul.mubr.bf16.gmra.mrb[0].mxu0 %v723
        %v1017 = vpop.f32.mrb[0].mxu0
        %v1018 = vadd.f32 0.0, %v1017
        %v1019 = vpop.f32.mrb[0].mxu0
        %v1020 = vpop.f32.mrb[0].mxu0
        %v1021 = vadd.f32 0.0, %v1020
        %v1022 = vpop.f32.mrb[0].mxu0
        %1023 = vmatprep.mubr.bf16.mxu0 %v726
        %1024 = vmatmul.mubr.bf16.gmra.mrb[0].mxu0 %v725
        %v1025 = vpop.f32.mrb[0].mxu0
        %v1026 = vadd.f32 0.0, %v1025
        %v1027 = vpop.f32.mrb[0].mxu0
        %v1028 = vpop.f32.mrb[0].mxu0
        %v1029 = vadd.f32 0.0, %v1028
        %v1030 = vpop.f32.mrb[0].mxu0
        %1031 = vmatprep.mubr.bf16.mxu0 %v728
        %1032 = vmatmul.mubr.bf16.gmra.mrb[0].mxu0 %v727
        %v1033 = vpop.f32.mrb[0].mxu0
        %v1034 = vadd.f32 0.0, %v1033
        %v1035 = vpop.f32.mrb[0].mxu0
        %v1036 = vpop.f32.mrb[0].mxu0
        %v1037 = vadd.f32 0.0, %v1036
        %v1038 = vpop.f32.mrb[0].mxu0
        %1039 = vmatprep.mubr.bf16.mxu0 %v730
        %1040 = vmatmul.mubr.bf16.gmra.mrb[0].mxu0 %v729
        %v1041 = vpop.f32.mrb[0].mxu0
        %v1042 = vadd.f32 0.0, %v1041
        %v1043 = vpop.f32.mrb[0].mxu0
        %v1044 = vpop.f32.mrb[0].mxu0
        %v1045 = vadd.f32 0.0, %v1044
        %v1046 = vpop.f32.mrb[0].mxu0
        %1047 = vmatprep.mubr.bf16.mxu0 %v732
        %1048 = vmatmul.mubr.bf16.gmra.mrb[0].mxu0 %v731
        %v1049 = vpop.f32.mrb[0].mxu0
        %v1050 = vadd.f32 0.0, %v1049
        %v1051 = vpop.f32.mrb[0].mxu0
        %v1052 = vpop.f32.mrb[0].mxu0
        %v1053 = vadd.f32 0.0, %v1052
        %v1054 = vpop.f32.mrb[0].mxu0
        %1055 = vmatprep.mubr.bf16.mxu0 %v734
        %1056 = vmatmul.mubr.bf16.gmra.mrb[0].mxu0 %v733
        %v1057 = vpop.f32.mrb[0].mxu0
        %v1058 = vadd.f32 0.0, %v1057
        %v1059 = vpop.f32.mrb[0].mxu0
        %v1060 = vpop.f32.mrb[0].mxu0
        %v1061 = vadd.f32 0.0, %v1060
        %v1062 = vpop.f32.mrb[0].mxu0
        %1063 = vmatprep.mubr.bf16.mxu0 %v736
        %1064 = vmatmul.mubr.bf16.gmra.mrb[0].mxu0 %v735
        %v1065 = vpop.f32.mrb[0].mxu0
        %v1066 = vadd.f32 0.0, %v1065
        %v1067 = vpop.f32.mrb[0].mxu0
        %v1068 = vpop.f32.mrb[0].mxu0
        %v1069 = vadd.f32 0.0, %v1068
        %v1070 = vpop.f32.mrb[0].mxu0
        %1071 = vmatprep.mubr.bf16.mxu0 %v738
        %1072 = vmatmul.mubr.bf16.gmra.mrb[0].mxu0 %v737
        %v1073 = vpop.f32.mrb[0].mxu0
        %v1074 = vadd.f32 0.0, %v1073
        %v1075 = vpop.f32.mrb[0].mxu0
        %v1076 = vpop.f32.mrb[0].mxu0
        %v1077 = vadd.f32 0.0, %v1076
        %v1078 = vpop.f32.mrb[0].mxu0
        %1079 = vmatprep.mubr.bf16.mxu0 %v740
        %1080 = vmatmul.mubr.bf16.gmra.mrb[0].mxu0 %v739
        %v1081 = vpop.f32.mrb[0].mxu0
        %v1082 = vadd.f32 0.0, %v1081
        %v1083 = vpop.f32.mrb[0].mxu0
        %v1084 = vpop.f32.mrb[0].mxu0
        %v1085 = vadd.f32 0.0, %v1084
        %v1086 = vpop.f32.mrb[0].mxu0
        %1087 = vmatprep.mubr.bf16.mxu0 %v742
        %1088 = vmatmul.mubr.bf16.gmra.mrb[0].mxu0 %v741
        %v1089 = vpop.f32.mrb[0].mxu0
        %v1090 = vadd.f32 0.0, %v1089
        %v1091 = vpop.f32.mrb[0].mxu0
        %v1092 = vpop.f32.mrb[0].mxu0
        %v1093 = vadd.f32 0.0, %v1092
        %v1094 = vpop.f32.mrb[0].mxu0
        %1095 = vdwg.mxu0
        %v1096 = vadd.f32 %v423, %v842
        %v1097 = vadd.f32 %v424, %v845
        %v1098 = vadd.f32 %v425, %v850
        %v1099 = vadd.f32 %v426, %v853
        %v1100 = vadd.f32 %v427, %v858
        %v1101 = vadd.f32 %v428, %v861
        %v1102 = vadd.f32 %v429, %v866
        %v1103 = vadd.f32 %v430, %v869
        %v1104 = vadd.f32 %v431, %v874
        %v1105 = vadd.f32 %v432, %v877
        %v1106 = vadd.f32 %v433, %v882
        %v1107 = vadd.f32 %v434, %v885
        %v1108 = vadd.f32 %v435, %v890
        %v1109 = vadd.f32 %v436, %v893
        %v1110 = vadd.f32 %v437, %v898
        %v1111 = vadd.f32 %v438, %v901
        %v1112 = vadd.f32 %v439, %v906
        %v1113 = vadd.f32 %v440, %v909
        %v1114 = vadd.f32 %v441, %v914
        %v1115 = vadd.f32 %v442, %v917
        %v1116 = vadd.f32 %v443, %v922
        %v1117 = vadd.f32 %v444, %v925
        %v1118 = vadd.f32 %v445, %v930
        %v1119 = vadd.f32 %v446, %v933
        %v1120 = vadd.f32 %v447, %v938
        %v1121 = vadd.f32 %v448, %v941
        %v1122 = vadd.f32 %v449, %v946
        %v1123 = vadd.f32 %v450, %v949
        %v1124 = vadd.f32 %v451, %v954
        %v1125 = vadd.f32 %v452, %v957
        %v1126 = vadd.f32 %v453, %v962
        %v1127 = vadd.f32 %v454, %v965
        %v1128 = vadd.f32 %v455, %v970
        %v1129 = vadd.f32 %v456, %v973
        %v1130 = vadd.f32 %v457, %v978
        %v1131 = vadd.f32 %v458, %v981
        %v1132 = vadd.f32 %v459, %v986
        %v1133 = vadd.f32 %v460, %v989
        %v1134 = vadd.f32 %v461, %v994
        %v1135 = vadd.f32 %v462, %v997
        %v1136 = vadd.f32 %v463, %v1002
        %v1137 = vadd.f32 %v464, %v1005
        %v1138 = vadd.f32 %v465, %v1010
        %v1139 = vadd.f32 %v466, %v1013
        %v1140 = vadd.f32 %v467, %v1018
        %v1141 = vadd.f32 %v468, %v1021
        %v1142 = vadd.f32 %v469, %v1026
        %v1143 = vadd.f32 %v470, %v1029
        %v1144 = vadd.f32 %v471, %v1034
        %v1145 = vadd.f32 %v472, %v1037
        %v1146 = vadd.f32 %v473, %v1042
        %v1147 = vadd.f32 %v474, %v1045
        %v1148 = vadd.f32 %v475, %v1050
        %v1149 = vadd.f32 %v476, %v1053
        %v1150 = vadd.f32 %v477, %v1058
        %v1151 = vadd.f32 %v478, %v1061
        %v1152 = vadd.f32 %v479, %v1066
        %v1153 = vadd.f32 %v480, %v1069
        %v1154 = vadd.f32 %v481, %v1074
        %v1155 = vadd.f32 %v482, %v1077
        %v1156 = vadd.f32 %v483, %v1082
        %v1157 = vadd.f32 %v484, %v1085
        %v1158 = vadd.f32 %v485, %v1090
        %v1159 = vadd.f32 %v486, %v1093
        %1160 = vst [vmem:[#allocation2] sm:$0xff] %v1096
        %1161 = vst [vmem:[#allocation2 + $0x8] sm:$0xff] %v1097
        %1162 = vst [vmem:[#allocation2 + $0x10] sm:$0xff] %v1098
        %1163 = vst [vmem:[#allocation2 + $0x18] sm:$0xff] %v1099
        %1164 = vst [vmem:[#allocation2 + $0x20] sm:$0xff] %v1100
        %1165 = vst [vmem:[#allocation2 + $0x28] sm:$0xff] %v1101
        %1166 = vst [vmem:[#allocation2 + $0x30] sm:$0xff] %v1102
        %1167 = vst [vmem:[#allocation2 + $0x38] sm:$0xff] %v1103
        %1168 = vst [vmem:[#allocation2 + $0x40] sm:$0xff] %v1104
        %1169 = vst [vmem:[#allocation2 + $0x48] sm:$0xff] %v1105
        %1170 = vst [vmem:[#allocation2 + $0x50] sm:$0xff] %v1106
        %1171 = vst [vmem:[#allocation2 + $0x58] sm:$0xff] %v1107
        %1172 = vst [vmem:[#allocation2 + $0x60] sm:$0xff] %v1108
        %1173 = vst [vmem:[#allocation2 + $0x68] sm:$0xff] %v1109
        %1174 = vst [vmem:[#allocation2 + $0x70] sm:$0xff] %v1110
        %1175 = vst [vmem:[#allocation2 + $0x78] sm:$0xff] %v1111
        %1176 = vst [vmem:[#allocation2 + $0x80] sm:$0xff] %v1112
        %1177 = vst [vmem:[#allocation2 + $0x88] sm:$0xff] %v1113
        %1178 = vst [vmem:[#allocation2 + $0x90] sm:$0xff] %v1114
        %1179 = vst [vmem:[#allocation2 + $0x98] sm:$0xff] %v1115
        %1180 = vst [vmem:[#allocation2 + $0xa0] sm:$0xff] %v1116
        %1181 = vst [vmem:[#allocation2 + $0xa8] sm:$0xff] %v1117
        %1182 = vst [vmem:[#allocation2 + $0xb0] sm:$0xff] %v1118
        %1183 = vst [vmem:[#allocation2 + $0xb8] sm:$0xff] %v1119
        %1184 = vst [vmem:[#allocation2 + $0xc0] sm:$0xff] %v1120
        %1185 = vst [vmem:[#allocation2 + $0xc8] sm:$0xff] %v1121
        %1186 = vst [vmem:[#allocation2 + $0xd0] sm:$0xff] %v1122
        %1187 = vst [vmem:[#allocation2 + $0xd8] sm:$0xff] %v1123
        %1188 = vst [vmem:[#allocation2 + $0xe0] sm:$0xff] %v1124
        %1189 = vst [vmem:[#allocation2 + $0xe8] sm:$0xff] %v1125
        %1190 = vst [vmem:[#allocation2 + $0xf0] sm:$0xff] %v1126
        %1191 = vst [vmem:[#allocation2 + $0xf8] sm:$0xff] %v1127
        %1192 = vst [vmem:[#allocation2 + $0x100] sm:$0xff] %v1128
        %1193 = vst [vmem:[#allocation2 + $0x108] sm:$0xff] %v1129
        %1194 = vst [vmem:[#allocation2 + $0x110] sm:$0xff] %v1130
        %1195 = vst [vmem:[#allocation2 + $0x118] sm:$0xff] %v1131
        %1196 = vst [vmem:[#allocation2 + $0x120] sm:$0xff] %v1132
        %1197 = vst [vmem:[#allocation2 + $0x128] sm:$0xff] %v1133
        %1198 = vst [vmem:[#allocation2 + $0x130] sm:$0xff] %v1134
        %1199 = vst [vmem:[#allocation2 + $0x138] sm:$0xff] %v1135
        %1200 = vst [vmem:[#allocation2 + $0x140] sm:$0xff] %v1136
        %1201 = vst [vmem:[#allocation2 + $0x148] sm:$0xff] %v1137
        %1202 = vst [vmem:[#allocation2 + $0x150] sm:$0xff] %v1138
        %1203 = vst [vmem:[#allocation2 + $0x158] sm:$0xff] %v1139
        %1204 = vst [vmem:[#allocation2 + $0x160] sm:$0xff] %v1140
        %1205 = vst [vmem:[#allocation2 + $0x168] sm:$0xff] %v1141
        %1206 = vst [vmem:[#allocation2 + $0x170] sm:$0xff] %v1142
        %1207 = vst [vmem:[#allocation2 + $0x178] sm:$0xff] %v1143
        %1208 = vst [vmem:[#allocation2 + $0x180] sm:$0xff] %v1144
        %1209 = vst [vmem:[#allocation2 + $0x188] sm:$0xff] %v1145
        %1210 = vst [vmem:[#allocation2 + $0x190] sm:$0xff] %v1146
        %1211 = vst [vmem:[#allocation2 + $0x198] sm:$0xff] %v1147
        %1212 = vst [vmem:[#allocation2 + $0x1a0] sm:$0xff] %v1148
        %1213 = vst [vmem:[#allocation2 + $0x1a8] sm:$0xff] %v1149
        %1214 = vst [vmem:[#allocation2 + $0x1b0] sm:$0xff] %v1150
        %1215 = vst [vmem:[#allocation2 + $0x1b8] sm:$0xff] %v1151
        %1216 = vst [vmem:[#allocation2 + $0x1c0] sm:$0xff] %v1152
        %1217 = vst [vmem:[#allocation2 + $0x1c8] sm:$0xff] %v1153
        %1218 = vst [vmem:[#allocation2 + $0x1d0] sm:$0xff] %v1154
        %1219 = vst [vmem:[#allocation2 + $0x1d8] sm:$0xff] %v1155
        %1220 = vst [vmem:[#allocation2 + $0x1e0] sm:$0xff] %v1156
        %1221 = vst [vmem:[#allocation2 + $0x1e8] sm:$0xff] %v1157
        %1222 = vst [vmem:[#allocation2 + $0x1f0] sm:$0xff] %v1158
        %1223 = vst [vmem:[#allocation2 + $0x1f8] sm:$0xff] %v1159
        // Predicated region
        $region41: #{tpu_custom_call.1} parent=31 // pred_check
          %p1224 = pneg %p241
        $region42: #{tpu_custom_call.1} parent=31 // pred_check_branch
          %1226 = sbr.rel (%p1224) target = $region44
        $region43: #{tpu_custom_call.1} parent=31 // pred_region
          %v1227 = vld [vmem:[#allocation2] sm:$0xff]
          %v1228 = vld [vmem:[#allocation2 + $0x8] sm:$0xff]
          %v1229 = vld [vmem:[#allocation2 + $0x10] sm:$0xff]
          %v1230 = vld [vmem:[#allocation2 + $0x18] sm:$0xff]
          %v1231 = vld [vmem:[#allocation2 + $0x20] sm:$0xff]
          %v1232 = vld [vmem:[#allocation2 + $0x28] sm:$0xff]
          %v1233 = vld [vmem:[#allocation2 + $0x30] sm:$0xff]
          %v1234 = vld [vmem:[#allocation2 + $0x38] sm:$0xff]
          %v1235 = vld [vmem:[#allocation2 + $0x40] sm:$0xff]
          %v1236 = vld [vmem:[#allocation2 + $0x48] sm:$0xff]
          %v1237 = vld [vmem:[#allocation2 + $0x50] sm:$0xff]
          %v1238 = vld [vmem:[#allocation2 + $0x58] sm:$0xff]
          %v1239 = vld [vmem:[#allocation2 + $0x60] sm:$0xff]
          %v1240 = vld [vmem:[#allocation2 + $0x68] sm:$0xff]
          %v1241 = vld [vmem:[#allocation2 + $0x70] sm:$0xff]
          %v1242 = vld [vmem:[#allocation2 + $0x78] sm:$0xff]
          %v1243 = vld [vmem:[#allocation2 + $0x80] sm:$0xff]
          %v1244 = vld [vmem:[#allocation2 + $0x88] sm:$0xff]
          %v1245 = vld [vmem:[#allocation2 + $0x90] sm:$0xff]
          %v1246 = vld [vmem:[#allocation2 + $0x98] sm:$0xff]
          %v1247 = vld [vmem:[#allocation2 + $0xa0] sm:$0xff]
          %v1248 = vld [vmem:[#allocation2 + $0xa8] sm:$0xff]
          %v1249 = vld [vmem:[#allocation2 + $0xb0] sm:$0xff]
          %v1250 = vld [vmem:[#allocation2 + $0xb8] sm:$0xff]
          %v1251 = vld [vmem:[#allocation2 + $0xc0] sm:$0xff]
          %v1252 = vld [vmem:[#allocation2 + $0xc8] sm:$0xff]
          %v1253 = vld [vmem:[#allocation2 + $0xd0] sm:$0xff]
          %v1254 = vld [vmem:[#allocation2 + $0xd8] sm:$0xff]
          %v1255 = vld [vmem:[#allocation2 + $0xe0] sm:$0xff]
          %v1256 = vld [vmem:[#allocation2 + $0xe8] sm:$0xff]
          %v1257 = vld [vmem:[#allocation2 + $0xf0] sm:$0xff]
          %v1258 = vld [vmem:[#allocation2 + $0xf8] sm:$0xff]
          %v1259 = vld [vmem:[#allocation2 + $0x100] sm:$0xff]
          %v1260 = vld [vmem:[#allocation2 + $0x108] sm:$0xff]
          %v1261 = vld [vmem:[#allocation2 + $0x110] sm:$0xff]
          %v1262 = vld [vmem:[#allocation2 + $0x118] sm:$0xff]
          %v1263 = vld [vmem:[#allocation2 + $0x120] sm:$0xff]
          %v1264 = vld [vmem:[#allocation2 + $0x128] sm:$0xff]
          %v1265 = vld [vmem:[#allocation2 + $0x130] sm:$0xff]
          %v1266 = vld [vmem:[#allocation2 + $0x138] sm:$0xff]
          %v1267 = vld [vmem:[#allocation2 + $0x140] sm:$0xff]
          %v1268 = vld [vmem:[#allocation2 + $0x148] sm:$0xff]
          %v1269 = vld [vmem:[#allocation2 + $0x150] sm:$0xff]
          %v1270 = vld [vmem:[#allocation2 + $0x158] sm:$0xff]
          %v1271 = vld [vmem:[#allocation2 + $0x160] sm:$0xff]
          %v1272 = vld [vmem:[#allocation2 + $0x168] sm:$0xff]
          %v1273 = vld [vmem:[#allocation2 + $0x170] sm:$0xff]
          %v1274 = vld [vmem:[#allocation2 + $0x178] sm:$0xff]
          %v1275 = vld [vmem:[#allocation2 + $0x180] sm:$0xff]
          %v1276 = vld [vmem:[#allocation2 + $0x188] sm:$0xff]
          %v1277 = vld [vmem:[#allocation2 + $0x190] sm:$0xff]
          %v1278 = vld [vmem:[#allocation2 + $0x198] sm:$0xff]
          %v1279 = vld [vmem:[#allocation2 + $0x1a0] sm:$0xff]
          %v1280 = vld [vmem:[#allocation2 + $0x1a8] sm:$0xff]
          %v1281 = vld [vmem:[#allocation2 + $0x1b0] sm:$0xff]
          %v1282 = vld [vmem:[#allocation2 + $0x1b8] sm:$0xff]
          %v1283 = vld [vmem:[#allocation2 + $0x1c0] sm:$0xff]
          %v1284 = vld [vmem:[#allocation2 + $0x1c8] sm:$0xff]
          %v1285 = vld [vmem:[#allocation2 + $0x1d0] sm:$0xff]
          %v1286 = vld [vmem:[#allocation2 + $0x1d8] sm:$0xff]
          %v1287 = vld [vmem:[#allocation2 + $0x1e0] sm:$0xff]
          %v1288 = vld [vmem:[#allocation2 + $0x1e8] sm:$0xff]
          %v1289 = vld [vmem:[#allocation2 + $0x1f0] sm:$0xff]
          %v1290 = vld [vmem:[#allocation2 + $0x1f8] sm:$0xff]
          %v1291 = vld [vmem:[%s237] sm:$0xff]
          %v1292 = vld [vmem:[%s237 + $0x8] sm:$0xff]
          %v1293 = vld [vmem:[%s237 + $0x10] sm:$0xff]
          %v1294 = vld [vmem:[%s237 + $0x18] sm:$0xff]
          %v1295 = vld [vmem:[%s237 + $0x20] sm:$0xff]
          %v1296 = vld [vmem:[%s237 + $0x28] sm:$0xff]
          %v1297 = vld [vmem:[%s237 + $0x30] sm:$0xff]
          %v1298 = vld [vmem:[%s237 + $0x38] sm:$0xff]
          %v1299 = vld [vmem:[%s237 + $0x40] sm:$0xff]
          %v1300 = vld [vmem:[%s237 + $0x48] sm:$0xff]
          %v1301 = vld [vmem:[%s237 + $0x50] sm:$0xff]
          %v1302 = vld [vmem:[%s237 + $0x58] sm:$0xff]
          %v1303 = vld [vmem:[%s237 + $0x60] sm:$0xff]
          %v1304 = vld [vmem:[%s237 + $0x68] sm:$0xff]
          %v1305 = vld [vmem:[%s237 + $0x70] sm:$0xff]
          %v1306 = vld [vmem:[%s237 + $0x78] sm:$0xff]
          %v1307 = vld [vmem:[%s237 + $0x80] sm:$0xff]
          %v1308 = vld [vmem:[%s237 + $0x88] sm:$0xff]
          %v1309 = vld [vmem:[%s237 + $0x90] sm:$0xff]
          %v1310 = vld [vmem:[%s237 + $0x98] sm:$0xff]
          %v1311 = vld [vmem:[%s237 + $0xa0] sm:$0xff]
          %v1312 = vld [vmem:[%s237 + $0xa8] sm:$0xff]
          %v1313 = vld [vmem:[%s237 + $0xb0] sm:$0xff]
          %v1314 = vld [vmem:[%s237 + $0xb8] sm:$0xff]
          %v1315 = vld [vmem:[%s237 + $0xc0] sm:$0xff]
          %v1316 = vld [vmem:[%s237 + $0xc8] sm:$0xff]
          %v1317 = vld [vmem:[%s237 + $0xd0] sm:$0xff]
          %v1318 = vld [vmem:[%s237 + $0xd8] sm:$0xff]
          %v1319 = vld [vmem:[%s237 + $0xe0] sm:$0xff]
          %v1320 = vld [vmem:[%s237 + $0xe8] sm:$0xff]
          %v1321 = vld [vmem:[%s237 + $0xf0] sm:$0xff]
          %v1322 = vld [vmem:[%s237 + $0xf8] sm:$0xff]
          %v1323 = vld [vmem:[%s237 + $0x100] sm:$0xff]
          %v1324 = vld [vmem:[%s237 + $0x108] sm:$0xff]
          %v1325 = vld [vmem:[%s237 + $0x110] sm:$0xff]
          %v1326 = vld [vmem:[%s237 + $0x118] sm:$0xff]
          %v1327 = vld [vmem:[%s237 + $0x120] sm:$0xff]
          %v1328 = vld [vmem:[%s237 + $0x128] sm:$0xff]
          %v1329 = vld [vmem:[%s237 + $0x130] sm:$0xff]
          %v1330 = vld [vmem:[%s237 + $0x138] sm:$0xff]
          %v1331 = vld [vmem:[%s237 + $0x140] sm:$0xff]
          %v1332 = vld [vmem:[%s237 + $0x148] sm:$0xff]
          %v1333 = vld [vmem:[%s237 + $0x150] sm:$0xff]
          %v1334 = vld [vmem:[%s237 + $0x158] sm:$0xff]
          %v1335 = vld [vmem:[%s237 + $0x160] sm:$0xff]
          %v1336 = vld [vmem:[%s237 + $0x168] sm:$0xff]
          %v1337 = vld [vmem:[%s237 + $0x170] sm:$0xff]
          %v1338 = vld [vmem:[%s237 + $0x178] sm:$0xff]
          %v1339 = vld [vmem:[%s237 + $0x180] sm:$0xff]
          %v1340 = vld [vmem:[%s237 + $0x188] sm:$0xff]
          %v1341 = vld [vmem:[%s237 + $0x190] sm:$0xff]
          %v1342 = vld [vmem:[%s237 + $0x198] sm:$0xff]
          %v1343 = vld [vmem:[%s237 + $0x1a0] sm:$0xff]
          %v1344 = vld [vmem:[%s237 + $0x1a8] sm:$0xff]
          %v1345 = vld [vmem:[%s237 + $0x1b0] sm:$0xff]
          %v1346 = vld [vmem:[%s237 + $0x1b8] sm:$0xff]
          %v1347 = vld [vmem:[%s237 + $0x1c0] sm:$0xff]
          %v1348 = vld [vmem:[%s237 + $0x1c8] sm:$0xff]
          %v1349 = vld [vmem:[%s237 + $0x1d0] sm:$0xff]
          %v1350 = vld [vmem:[%s237 + $0x1d8] sm:$0xff]
          %v1351 = vld [vmem:[%s237 + $0x1e0] sm:$0xff]
          %v1352 = vld [vmem:[%s237 + $0x1e8] sm:$0xff]
          %v1353 = vld [vmem:[%s237 + $0x1f0] sm:$0xff]
          %v1354 = vld [vmem:[%s237 + $0x1f8] sm:$0xff]
          %1356 = vset.pattern.permute.xlu0 0
          %1357 = vperm.xlu0 %1356, %v1291
          %v1358 = vpop.permute.xlu0 %1357
          %1361 = vset.pattern.permute.xlu0 0
          %1362 = vperm.xlu0 %1361, %v1292
          %v1363 = vpop.permute.xlu0 %1362
          %1366 = vset.pattern.permute.xlu0 0
          %1367 = vperm.xlu0 %1366, %v1293
          %v1368 = vpop.permute.xlu0 %1367
          %1371 = vset.pattern.permute.xlu0 0
          %1372 = vperm.xlu0 %1371, %v1294
          %v1373 = vpop.permute.xlu0 %1372
          %1376 = vset.pattern.permute.xlu0 0
          %1377 = vperm.xlu0 %1376, %v1295
          %v1378 = vpop.permute.xlu0 %1377
          %1381 = vset.pattern.permute.xlu0 0
          %1382 = vperm.xlu0 %1381, %v1296
          %v1383 = vpop.permute.xlu0 %1382
          %1386 = vset.pattern.permute.xlu0 0
          %1387 = vperm.xlu0 %1386, %v1297
          %v1388 = vpop.permute.xlu0 %1387
          %1391 = vset.pattern.permute.xlu0 0
          %1392 = vperm.xlu0 %1391, %v1298
          %v1393 = vpop.permute.xlu0 %1392
          %1396 = vset.pattern.permute.xlu0 0
          %1397 = vperm.xlu0 %1396, %v1299
          %v1398 = vpop.permute.xlu0 %1397
          %1401 = vset.pattern.permute.xlu0 0
          %1402 = vperm.xlu0 %1401, %v1300
          %v1403 = vpop.permute.xlu0 %1402
          %1406 = vset.pattern.permute.xlu0 0
          %1407 = vperm.xlu0 %1406, %v1301
          %v1408 = vpop.permute.xlu0 %1407
          %1411 = vset.pattern.permute.xlu0 0
          %1412 = vperm.xlu0 %1411, %v1302
          %v1413 = vpop.permute.xlu0 %1412
          %1416 = vset.pattern.permute.xlu0 0
          %1417 = vperm.xlu0 %1416, %v1303
          %v1418 = vpop.permute.xlu0 %1417
          %1421 = vset.pattern.permute.xlu0 0
          %1422 = vperm.xlu0 %1421, %v1304
          %v1423 = vpop.permute.xlu0 %1422
          %1426 = vset.pattern.permute.xlu0 0
          %1427 = vperm.xlu0 %1426, %v1305
          %v1428 = vpop.permute.xlu0 %1427
          %1431 = vset.pattern.permute.xlu0 0
          %1432 = vperm.xlu0 %1431, %v1306
          %v1433 = vpop.permute.xlu0 %1432
          %1436 = vset.pattern.permute.xlu0 0
          %1437 = vperm.xlu0 %1436, %v1307
          %v1438 = vpop.permute.xlu0 %1437
          %1441 = vset.pattern.permute.xlu0 0
          %1442 = vperm.xlu0 %1441, %v1308
          %v1443 = vpop.permute.xlu0 %1442
          %1446 = vset.pattern.permute.xlu0 0
          %1447 = vperm.xlu0 %1446, %v1309
          %v1448 = vpop.permute.xlu0 %1447
          %1451 = vset.pattern.permute.xlu0 0
          %1452 = vperm.xlu0 %1451, %v1310
          %v1453 = vpop.permute.xlu0 %1452
          %1456 = vset.pattern.permute.xlu0 0
          %1457 = vperm.xlu0 %1456, %v1311
          %v1458 = vpop.permute.xlu0 %1457
          %1461 = vset.pattern.permute.xlu0 0
          %1462 = vperm.xlu0 %1461, %v1312
          %v1463 = vpop.permute.xlu0 %1462
          %1466 = vset.pattern.permute.xlu0 0
          %1467 = vperm.xlu0 %1466, %v1313
          %v1468 = vpop.permute.xlu0 %1467
          %1471 = vset.pattern.permute.xlu0 0
          %1472 = vperm.xlu0 %1471, %v1314
          %v1473 = vpop.permute.xlu0 %1472
          %1476 = vset.pattern.permute.xlu0 0
          %1477 = vperm.xlu0 %1476, %v1315
          %v1478 = vpop.permute.xlu0 %1477
          %1481 = vset.pattern.permute.xlu0 0
          %1482 = vperm.xlu0 %1481, %v1316
          %v1483 = vpop.permute.xlu0 %1482
          %1486 = vset.pattern.permute.xlu0 0
          %1487 = vperm.xlu0 %1486, %v1317
          %v1488 = vpop.permute.xlu0 %1487
          %1491 = vset.pattern.permute.xlu0 0
          %1492 = vperm.xlu0 %1491, %v1318
          %v1493 = vpop.permute.xlu0 %1492
          %1496 = vset.pattern.permute.xlu0 0
          %1497 = vperm.xlu0 %1496, %v1319
          %v1498 = vpop.permute.xlu0 %1497
          %1501 = vset.pattern.permute.xlu0 0
          %1502 = vperm.xlu0 %1501, %v1320
          %v1503 = vpop.permute.xlu0 %1502
          %1506 = vset.pattern.permute.xlu0 0
          %1507 = vperm.xlu0 %1506, %v1321
          %v1508 = vpop.permute.xlu0 %1507
          %1511 = vset.pattern.permute.xlu0 0
          %1512 = vperm.xlu0 %1511, %v1322
          %v1513 = vpop.permute.xlu0 %1512
          %1516 = vset.pattern.permute.xlu0 0
          %1517 = vperm.xlu0 %1516, %v1323
          %v1518 = vpop.permute.xlu0 %1517
          %1521 = vset.pattern.permute.xlu0 0
          %1522 = vperm.xlu0 %1521, %v1324
          %v1523 = vpop.permute.xlu0 %1522
          %1526 = vset.pattern.permute.xlu0 0
          %1527 = vperm.xlu0 %1526, %v1325
          %v1528 = vpop.permute.xlu0 %1527
          %1531 = vset.pattern.permute.xlu0 0
          %1532 = vperm.xlu0 %1531, %v1326
          %v1533 = vpop.permute.xlu0 %1532
          %1536 = vset.pattern.permute.xlu0 0
          %1537 = vperm.xlu0 %1536, %v1327
          %v1538 = vpop.permute.xlu0 %1537
          %1541 = vset.pattern.permute.xlu0 0
          %1542 = vperm.xlu0 %1541, %v1328
          %v1543 = vpop.permute.xlu0 %1542
          %1546 = vset.pattern.permute.xlu0 0
          %1547 = vperm.xlu0 %1546, %v1329
          %v1548 = vpop.permute.xlu0 %1547
          %1551 = vset.pattern.permute.xlu0 0
          %1552 = vperm.xlu0 %1551, %v1330
          %v1553 = vpop.permute.xlu0 %1552
          %1556 = vset.pattern.permute.xlu0 0
          %1557 = vperm.xlu0 %1556, %v1331
          %v1558 = vpop.permute.xlu0 %1557
          %1561 = vset.pattern.permute.xlu0 0
          %1562 = vperm.xlu0 %1561, %v1332
          %v1563 = vpop.permute.xlu0 %1562
          %1566 = vset.pattern.permute.xlu0 0
          %1567 = vperm.xlu0 %1566, %v1333
          %v1568 = vpop.permute.xlu0 %1567
          %1571 = vset.pattern.permute.xlu0 0
          %1572 = vperm.xlu0 %1571, %v1334
          %v1573 = vpop.permute.xlu0 %1572
          %1576 = vset.pattern.permute.xlu0 0
          %1577 = vperm.xlu0 %1576, %v1335
          %v1578 = vpop.permute.xlu0 %1577
          %1581 = vset.pattern.permute.xlu0 0
          %1582 = vperm.xlu0 %1581, %v1336
          %v1583 = vpop.permute.xlu0 %1582
          %1586 = vset.pattern.permute.xlu0 0
          %1587 = vperm.xlu0 %1586, %v1337
          %v1588 = vpop.permute.xlu0 %1587
          %1591 = vset.pattern.permute.xlu0 0
          %1592 = vperm.xlu0 %1591, %v1338
          %v1593 = vpop.permute.xlu0 %1592
          %1596 = vset.pattern.permute.xlu0 0
          %1597 = vperm.xlu0 %1596, %v1339
          %v1598 = vpop.permute.xlu0 %1597
          %1601 = vset.pattern.permute.xlu0 0
          %1602 = vperm.xlu0 %1601, %v1340
          %v1603 = vpop.permute.xlu0 %1602
          %1606 = vset.pattern.permute.xlu0 0
          %1607 = vperm.xlu0 %1606, %v1341
          %v1608 = vpop.permute.xlu0 %1607
          %1611 = vset.pattern.permute.xlu0 0
          %1612 = vperm.xlu0 %1611, %v1342
          %v1613 = vpop.permute.xlu0 %1612
          %1616 = vset.pattern.permute.xlu0 0
          %1617 = vperm.xlu0 %1616, %v1343
          %v1618 = vpop.permute.xlu0 %1617
          %1621 = vset.pattern.permute.xlu0 0
          %1622 = vperm.xlu0 %1621, %v1344
          %v1623 = vpop.permute.xlu0 %1622
          %1626 = vset.pattern.permute.xlu0 0
          %1627 = vperm.xlu0 %1626, %v1345
          %v1628 = vpop.permute.xlu0 %1627
          %1631 = vset.pattern.permute.xlu0 0
          %1632 = vperm.xlu0 %1631, %v1346
          %v1633 = vpop.permute.xlu0 %1632
          %1636 = vset.pattern.permute.xlu0 0
          %1637 = vperm.xlu0 %1636, %v1347
          %v1638 = vpop.permute.xlu0 %1637
          %1641 = vset.pattern.permute.xlu0 0
          %1642 = vperm.xlu0 %1641, %v1348
          %v1643 = vpop.permute.xlu0 %1642
          %1646 = vset.pattern.permute.xlu0 0
          %1647 = vperm.xlu0 %1646, %v1349
          %v1648 = vpop.permute.xlu0 %1647
          %1651 = vset.pattern.permute.xlu0 0
          %1652 = vperm.xlu0 %1651, %v1350
          %v1653 = vpop.permute.xlu0 %1652
          %1656 = vset.pattern.permute.xlu0 0
          %1657 = vperm.xlu0 %1656, %v1351
          %v1658 = vpop.permute.xlu0 %1657
          %1661 = vset.pattern.permute.xlu0 0
          %1662 = vperm.xlu0 %1661, %v1352
          %v1663 = vpop.permute.xlu0 %1662
          %1666 = vset.pattern.permute.xlu0 0
          %1667 = vperm.xlu0 %1666, %v1353
          %v1668 = vpop.permute.xlu0 %1667
          %1671 = vset.pattern.permute.xlu0 0
          %1672 = vperm.xlu0 %1671, %v1354
          %v1673 = vpop.permute.xlu0 %1672
          %v1675 = vmul.f32 %v1227, %v1358
          %v1676 = vmul.f32 %v1228, %v1363
          %v1677 = vmul.f32 %v1229, %v1368
          %v1678 = vmul.f32 %v1230, %v1373
          %v1679 = vmul.f32 %v1231, %v1378
          %v1680 = vmul.f32 %v1232, %v1383
          %v1681 = vmul.f32 %v1233, %v1388
          %v1682 = vmul.f32 %v1234, %v1393
          %v1683 = vmul.f32 %v1235, %v1398
          %v1684 = vmul.f32 %v1236, %v1403
          %v1685 = vmul.f32 %v1237, %v1408
          %v1686 = vmul.f32 %v1238, %v1413
          %v1687 = vmul.f32 %v1239, %v1418
          %v1688 = vmul.f32 %v1240, %v1423
          %v1689 = vmul.f32 %v1241, %v1428
          %v1690 = vmul.f32 %v1242, %v1433
          %v1691 = vmul.f32 %v1243, %v1438
          %v1692 = vmul.f32 %v1244, %v1443
          %v1693 = vmul.f32 %v1245, %v1448
          %v1694 = vmul.f32 %v1246, %v1453
          %v1695 = vmul.f32 %v1247, %v1458
          %v1696 = vmul.f32 %v1248, %v1463
          %v1697 = vmul.f32 %v1249, %v1468
          %v1698 = vmul.f32 %v1250, %v1473
          %v1699 = vmul.f32 %v1251, %v1478
          %v1700 = vmul.f32 %v1252, %v1483
          %v1701 = vmul.f32 %v1253, %v1488
          %v1702 = vmul.f32 %v1254, %v1493
          %v1703 = vmul.f32 %v1255, %v1498
          %v1704 = vmul.f32 %v1256, %v1503
          %v1705 = vmul.f32 %v1257, %v1508
          %v1706 = vmul.f32 %v1258, %v1513
          %v1707 = vmul.f32 %v1259, %v1518
          %v1708 = vmul.f32 %v1260, %v1523
          %v1709 = vmul.f32 %v1261, %v1528
          %v1710 = vmul.f32 %v1262, %v1533
          %v1711 = vmul.f32 %v1263, %v1538
          %v1712 = vmul.f32 %v1264, %v1543
          %v1713 = vmul.f32 %v1265, %v1548
          %v1714 = vmul.f32 %v1266, %v1553
          %v1715 = vmul.f32 %v1267, %v1558
          %v1716 = vmul.f32 %v1268, %v1563
          %v1717 = vmul.f32 %v1269, %v1568
          %v1718 = vmul.f32 %v1270, %v1573
          %v1719 = vmul.f32 %v1271, %v1578
          %v1720 = vmul.f32 %v1272, %v1583
          %v1721 = vmul.f32 %v1273, %v1588
          %v1722 = vmul.f32 %v1274, %v1593
          %v1723 = vmul.f32 %v1275, %v1598
          %v1724 = vmul.f32 %v1276, %v1603
          %v1725 = vmul.f32 %v1277, %v1608
          %v1726 = vmul.f32 %v1278, %v1613
          %v1727 = vmul.f32 %v1279, %v1618
          %v1728 = vmul.f32 %v1280, %v1623
          %v1729 = vmul.f32 %v1281, %v1628
          %v1730 = vmul.f32 %v1282, %v1633
          %v1731 = vmul.f32 %v1283, %v1638
          %v1732 = vmul.f32 %v1284, %v1643
          %v1733 = vmul.f32 %v1285, %v1648
          %v1734 = vmul.f32 %v1286, %v1653
          %v1735 = vmul.f32 %v1287, %v1658
          %v1736 = vmul.f32 %v1288, %v1663
          %v1737 = vmul.f32 %v1289, %v1668
          %v1738 = vmul.f32 %v1290, %v1673
          %1739 = vst [vmem:[%s220] sm:$0xff] %v1675
          %1740 = vst [vmem:[%s220 + $0x8] sm:$0xff] %v1676
          %1741 = vst [vmem:[%s220 + $0x10] sm:$0xff] %v1677
          %1742 = vst [vmem:[%s220 + $0x18] sm:$0xff] %v1678
          %1743 = vst [vmem:[%s220 + $0x20] sm:$0xff] %v1679
          %1744 = vst [vmem:[%s220 + $0x28] sm:$0xff] %v1680
          %1745 = vst [vmem:[%s220 + $0x30] sm:$0xff] %v1681
          %1746 = vst [vmem:[%s220 + $0x38] sm:$0xff] %v1682
          %1747 = vst [vmem:[%s220 + $0x40] sm:$0xff] %v1683
          %1748 = vst [vmem:[%s220 + $0x48] sm:$0xff] %v1684
          %1749 = vst [vmem:[%s220 + $0x50] sm:$0xff] %v1685
          %1750 = vst [vmem:[%s220 + $0x58] sm:$0xff] %v1686
          %1751 = vst [vmem:[%s220 + $0x60] sm:$0xff] %v1687
          %1752 = vst [vmem:[%s220 + $0x68] sm:$0xff] %v1688
          %1753 = vst [vmem:[%s220 + $0x70] sm:$0xff] %v1689
          %1754 = vst [vmem:[%s220 + $0x78] sm:$0xff] %v1690
          %1755 = vst [vmem:[%s220 + $0x80] sm:$0xff] %v1691
          %1756 = vst [vmem:[%s220 + $0x88] sm:$0xff] %v1692
          %1757 = vst [vmem:[%s220 + $0x90] sm:$0xff] %v1693
          %1758 = vst [vmem:[%s220 + $0x98] sm:$0xff] %v1694
          %1759 = vst [vmem:[%s220 + $0xa0] sm:$0xff] %v1695
          %1760 = vst [vmem:[%s220 + $0xa8] sm:$0xff] %v1696
          %1761 = vst [vmem:[%s220 + $0xb0] sm:$0xff] %v1697
          %1762 = vst [vmem:[%s220 + $0xb8] sm:$0xff] %v1698
          %1763 = vst [vmem:[%s220 + $0xc0] sm:$0xff] %v1699
          %1764 = vst [vmem:[%s220 + $0xc8] sm:$0xff] %v1700
          %1765 = vst [vmem:[%s220 + $0xd0] sm:$0xff] %v1701
          %1766 = vst [vmem:[%s220 + $0xd8] sm:$0xff] %v1702
          %1767 = vst [vmem:[%s220 + $0xe0] sm:$0xff] %v1703
          %1768 = vst [vmem:[%s220 + $0xe8] sm:$0xff] %v1704
          %1769 = vst [vmem:[%s220 + $0xf0] sm:$0xff] %v1705
          %1770 = vst [vmem:[%s220 + $0xf8] sm:$0xff] %v1706
          %1771 = vst [vmem:[%s220 + $0x100] sm:$0xff] %v1707
          %1772 = vst [vmem:[%s220 + $0x108] sm:$0xff] %v1708
          %1773 = vst [vmem:[%s220 + $0x110] sm:$0xff] %v1709
          %1774 = vst [vmem:[%s220 + $0x118] sm:$0xff] %v1710
          %1775 = vst [vmem:[%s220 + $0x120] sm:$0xff] %v1711
          %1776 = vst [vmem:[%s220 + $0x128] sm:$0xff] %v1712
          %1777 = vst [vmem:[%s220 + $0x130] sm:$0xff] %v1713
          %1778 = vst [vmem:[%s220 + $0x138] sm:$0xff] %v1714
          %1779 = vst [vmem:[%s220 + $0x140] sm:$0xff] %v1715
          %1780 = vst [vmem:[%s220 + $0x148] sm:$0xff] %v1716
          %1781 = vst [vmem:[%s220 + $0x150] sm:$0xff] %v1717
          %1782 = vst [vmem:[%s220 + $0x158] sm:$0xff] %v1718
          %1783 = vst [vmem:[%s220 + $0x160] sm:$0xff] %v1719
          %1784 = vst [vmem:[%s220 + $0x168] sm:$0xff] %v1720
          %1785 = vst [vmem:[%s220 + $0x170] sm:$0xff] %v1721
          %1786 = vst [vmem:[%s220 + $0x178] sm:$0xff] %v1722
          %1787 = vst [vmem:[%s220 + $0x180] sm:$0xff] %v1723
          %1788 = vst [vmem:[%s220 + $0x188] sm:$0xff] %v1724
          %1789 = vst [vmem:[%s220 + $0x190] sm:$0xff] %v1725
          %1790 = vst [vmem:[%s220 + $0x198] sm:$0xff] %v1726
          %1791 = vst [vmem:[%s220 + $0x1a0] sm:$0xff] %v1727
          %1792 = vst [vmem:[%s220 + $0x1a8] sm:$0xff] %v1728
          %1793 = vst [vmem:[%s220 + $0x1b0] sm:$0xff] %v1729
          %1794 = vst [vmem:[%s220 + $0x1b8] sm:$0xff] %v1730
          %1795 = vst [vmem:[%s220 + $0x1c0] sm:$0xff] %v1731
          %1796 = vst [vmem:[%s220 + $0x1c8] sm:$0xff] %v1732
          %1797 = vst [vmem:[%s220 + $0x1d0] sm:$0xff] %v1733
          %1798 = vst [vmem:[%s220 + $0x1d8] sm:$0xff] %v1734
          %1799 = vst [vmem:[%s220 + $0x1e0] sm:$0xff] %v1735
          %1800 = vst [vmem:[%s220 + $0x1e8] sm:$0xff] %v1736
          %1801 = vst [vmem:[%s220 + $0x1f0] sm:$0xff] %v1737
          %1802 = vst [vmem:[%s220 + $0x1f8] sm:$0xff] %v1738
        $region44: #{tpu_custom_call.1} parent=31 // pred_fallthru
          _
        %s1803 = sand.u32 %s113, 1
        %s1804 = scalar_lea.sflag [#allocation5], %s1803
        %s1805 = sand.u32 %s113, 1
        %s1806 = smul.addr %s1805, 512
        %s1807 = scalar_lea.vmem [#allocation6], %s1806
        // Predicated region
        $region45: #{tpu_custom_call.1} parent=31 // pred_check
          %p1808 = pneg %p123
        $region46: #{tpu_custom_call.1} parent=31 // pred_check_branch
          %1810 = sbr.rel (%p1808) target = $region48
        $region47: #{tpu_custom_call.1} parent=31 // pred_region
          %s1811 = smul.u32 64, %s22
          %s1813 = ssub.s32 8192, 8192
          %1814 = vsyncadd %s1804, %s1813
          %s1815 = smul.addr %s1811, 128
          %s1816 = scalar_lea.hbm %s3, %s1815
          %s1817 = sshll.u32 %s1807, 4
          %s1818 = int_to_ptr.vmem [resolvable:$true] %s1817
          %1823 = dma.vmem_to_hbm [thread:$0]  %s1818, 8192, %s1816, %s1804, 128, 128, 8
        $region48: #{tpu_custom_call.1} parent=31 // pred_fallthru
          _
      $region32: #{tpu_custom_call.1} parent=5 // pred_fallthru
        _
      %p1824 = scmp.le.s32.totalorder 2, %s13
      // Predicated region
      $region49: #{tpu_custom_call.1} parent=5 // pred_check
        %p1825 = pneg %p1824
      $region50: #{tpu_custom_call.1} parent=5 // pred_check_branch
        %1827 = sbr.rel (%p1825) target = $region52
      $region51: #{tpu_custom_call.1} parent=5 // pred_region
        %s1828 = ssub.s32 %s13, 2
        // Predicated region
        $region53: #{tpu_custom_call.1} parent=51 // pred_check
          %p1829 = pneg %p129
        $region54: #{tpu_custom_call.1} parent=51 // pred_check_branch
          %1831 = sbr.rel (%p1829) target = $region56
        $region55: #{tpu_custom_call.1} parent=51 // pred_region
          %s1832 = sand.u32 %s114, 1
          %s1833 = scalar_lea.sflag [#allocation5], %s1832
          %s1834 = sand.u32 %s114, 1
          %s1835 = smul.addr %s1834, 512
          %s1836 = scalar_lea.vmem [#allocation6], %s1835
          %1837 = dma.done %s1833, 8192
        $region56: #{tpu_custom_call.1} parent=51 // pred_fallthru
          _
      $region52: #{tpu_custom_call.1} parent=5 // pred_fallthru
        _
    $region6: #{tpu_custom_call.1} parent=1 // loop_footer
      %s17 = sadd.s32 1, %s13
    $region7: #{tpu_custom_call.1} parent=1 // loop_footer_branch
      %12 = sbr.rel target = $region3
    $region8: #{tpu_custom_call.1} parent=1 // loop_exit
      _
    %1838 = vsyncpa [#allocation4], 1
    %s1839 = scalar_lea.sflag [#allocation4], 1
    %1840 = vsyncpa %s1839, 1
    %1841 = vsyncpa [#allocation5], 1
    %s1842 = scalar_lea.sflag [#allocation5], 1
    %1843 = vsyncpa %s1842, 1

</llo_original>
